<compile_context>
chip_gen: v7x
topology: tpu7x:2x2x1
jax: 0.10.0
libtpu: 0.0.40
codegen_flags: <defaults>
</compile_context>

<pallas_src>
import functools

import jax
import jax.numpy as jnp
from jax import lax
from jax.experimental import pallas as pl
from jax.experimental.pallas import tpu as pltpu

N_ITER = 24  # dm <= 1 and halves each step; ~24 halvings is below f32 eps
             # relative to tau, matching entmax_bisect's default 50 in f32.


def _g_att_kernel(scal_ref, ct_ref, c_ref, x_ref, mask_ref,
                  wg1t_ref, wg2t_ref, wg0_ref, bias_ref, out_ref,
                  *, n_iter, int_exp):
    # scal_ref : SMEM (3,)      [alpha-1, 1/(alpha-1), (1/S)**(alpha-1)]
    # ct_ref   : (TB, D)   bf16  C_target tile
    # c_ref    : (TB, S, D) bf16 keys, native layout
    # x_ref    : (TB, S, Dv) bf16 values
    # mask_ref : (TB, S) int32
    # wg1t/wg2t: (D, D) bf16     pre-transposed so k @ WgT == nn.Linear(k)
    # wg0_ref  : (1, D) f32 ; bias_ref : (1, D) f32
    # out_ref  : (TB, Dv) f32
    tb, seq, d = c_ref.shape
    dv = x_ref.shape[-1]
    f32 = jnp.float32

    am1 = scal_ref[0]
    pow_term = scal_ref[2]

    # ---- score stage: batched bf16 MXU matmuls in native layout ----
    qp = jnp.dot(ct_ref[...], wg2t_ref[...], preferred_element_type=f32)
    qp = qp + bias_ref[...]                                      # (TB, D)

    kp = jnp.dot(c_ref[...].reshape(tb * seq, d), wg1t_ref[...],
                 preferred_element_type=f32).reshape(tb, seq, d)  # (TB, S, D)
    h = jnp.maximum(kp + qp[:, None, :], 0.0)                     # (TB, S, D)

    # Wg0 contraction on the VPU + lane reduce (no M=1 MXU matvec).
    s = jnp.sum(h * wg0_ref[...], axis=-1)                        # (TB, S)

    # masked_fill(mask == 0, -inf)
    s = jnp.where(mask_ref[...] == 0, -jnp.inf, s)

    # ---- entmax_bisect over the sequence (lane) axis ----
    # TODO(synk): only a global scalar alpha > 1 is supported (alpha == 1
    # softmax limit and per-row alpha tensors are not handled).
    # TODO(synk): for S << 128 the bisection runs at S/128 lane occupancy;
    # packing several batch rows per lane row would recover that throughput.
    if int_exp is not None:
        # 1/(alpha-1) is a small integer (alpha=1.5 -> square): pure VPU,
        # no EUP transcendentals in the dominant loop.
        def _p_of(x):
            x = jnp.maximum(x, 0.0)
            r = x
            for _ in range(int_exp - 1):
                r = r * x
            return r
    else:
        inv_am1 = scal_ref[1]

        def _p_of(x):
            return jnp.exp(inv_am1 * jnp.log(jnp.maximum(x, 0.0)))

    Xs = s * am1
    max_val = jnp.max(Xs, axis=-1, keepdims=True)                 # (TB, 1)
    tau_lo = max_val - 1.0
    tau_hi = max_val - pow_term

    p_m = _p_of(Xs - tau_lo)
    f_lo = jnp.sum(p_m, axis=-1, keepdims=True) - 1.0
    dm = tau_hi - tau_lo
    for _ in range(n_iter):                                       # fully unrolled
        dm = dm * 0.5
        tau_m = tau_lo + dm
        p_m = _p_of(Xs - tau_m)
        f_m = jnp.sum(p_m, axis=-1, keepdims=True) - 1.0
        tau_lo = jnp.where(f_m * f_lo >= 0.0, tau_m, tau_lo)

    # ensure_sum_one folded into the weights (EUP approx reciprocal).
    inv_sum = pl.reciprocal(jnp.sum(p_m, axis=-1, keepdims=True), approx=True)
    w = p_m * inv_sum                                              # (TB, S)

    # ---- p @ X: one MXU matmul via block-diagonal p, single full store ----
    rows = lax.broadcasted_iota(jnp.int32, (tb, tb * seq), 0)
    cols = lax.broadcasted_iota(jnp.int32, (tb, tb * seq), 1)
    lo = rows * seq
    p_tiled = jnp.concatenate([w] * tb, axis=-1)                   # (TB, TB*S)
    p_bd = jnp.where((cols >= lo) & (cols < lo + seq), p_tiled, 0.0)
    x_flat = x_ref[...].reshape(tb * seq, dv).astype(f32)          # (TB*S, Dv)
    out_ref[...] = jnp.dot(p_bd, x_flat, preferred_element_type=f32)


def g_att_forward(params, C_target, C, X, alpha, mask, n_iter=N_ITER):
    B, S, D = C.shape
    Dv = X.shape[-1]
    f32, bf16 = jnp.float32, jnp.bfloat16

    # Static-alpha fast path: integer exponent 1/(alpha-1) -> VPU-only pow.
    int_exp = None
    try:
        a_static = float(alpha)
        inv = 1.0 / (a_static - 1.0)
        if a_static > 1.0 and abs(inv - round(inv)) < 1e-6 and 1 <= round(inv) <= 4:
            int_exp = int(round(inv))
    except Exception:
        int_exp = None

    # Pad the batch to a multiple of 8.  Padded rows get an all-ones mask so
    # the entmax stays finite; their outputs are sliced off below.
    Bp = ((B + 7) // 8) * 8
    pad = Bp - B
    if pad:
        C_target = jnp.concatenate(
            [C_target, jnp.zeros((pad, D), C_target.dtype)], axis=0)
        C = jnp.concatenate([C, jnp.zeros((pad, S, D), C.dtype)], axis=0)
        X = jnp.concatenate([X, jnp.zeros((pad, S, Dv), X.dtype)], axis=0)
        mask = jnp.concatenate([mask, jnp.ones((pad, S), mask.dtype)], axis=0)

    # Derive TB + the scoped VMEM limit from the device (v7x: 64 MiB VMEM,
    # v5e/v6e: 128 MiB; default scoped limit is only 32 MiB everywhere).
    try:
        info = pltpu.get_tpu_info()
        vmem_cap = int(getattr(info, "vmem_capacity_bytes", 128 * 1024 * 1024))
    except Exception:
        vmem_cap = 128 * 1024 * 1024
    vmem_limit = max(32 * 1024 * 1024,
                     min(int(vmem_cap * 0.8), vmem_cap - (16 << 20)))

    # Double-buffered bytes per batch row of the big streamed inputs (bf16).
    per_row = 2 * (S * D * 2 + S * Dv * 2 + S * 4 + D * 2)
    tb_cap = max(8, ((vmem_limit // 4) // max(per_row, 1)) // 8 * 8)
    TB = 8
    # Grow TB while it fits VMEM, still divides the batch, and keeps nt >= 2
    # so v7x's second TensorCore gets work on the "parallel" batch-tile axis.
    while TB * 2 <= tb_cap and Bp % (TB * 2) == 0 and Bp // (TB * 2) >= 2:
        TB *= 2
    nt = Bp // TB

    # TODO(synk): the bf16 casts below are one extra HBM pass each; consider
    # CompilerParams(allow_input_fusion=...) to fuse them into the input DMA.
    # TODO(synk): on v7x, if DMA becomes exposed at small TB, add
    # pipeline_mode=pl.Buffered(3) on the C and X BlockSpecs.
    ct = jnp.asarray(C_target, f32).astype(bf16)
    c = jnp.asarray(C, f32).astype(bf16)
    xv = jnp.asarray(X, f32).astype(bf16)
    wg1T = jnp.asarray(params["Wg1"], f32).T.astype(bf16)
    wg2T = jnp.asarray(params["Wg2"], f32).T.astype(bf16)
    wg0 = jnp.asarray(params["Wg0"], f32).reshape(1, D)
    bias = jnp.asarray(params["bias_alpha"], f32).reshape(1, D)
    mask2 = jnp.asarray(mask, jnp.int32).reshape(Bp, S)

    alpha_f = jnp.asarray(alpha, f32)
    am1 = alpha_f - 1.0
    scal = jnp.stack(
        [am1, 1.0 / am1, jnp.power(jnp.float32(1.0 / S), am1)]).astype(f32)

    kernel = functools.partial(_g_att_kernel, n_iter=n_iter, int_exp=int_exp)

    out2d = pl.pallas_call(
        kernel,
        out_shape=jax.ShapeDtypeStruct((Bp, Dv), f32),
        grid=(nt,),
        in_specs=[
            pl.BlockSpec(memory_space=pltpu.MemorySpace.SMEM),   # alpha scalars
            pl.BlockSpec((TB, D), lambda i: (i, 0)),             # C_target
            pl.BlockSpec((TB, S, D), lambda i: (i, 0, 0)),       # C (keys)
            pl.BlockSpec((TB, S, Dv), lambda i: (i, 0, 0)),      # X (values)
            pl.BlockSpec((TB, S), lambda i: (i, 0)),             # mask
            pl.BlockSpec((D, D), lambda i: (0, 0)),              # Wg1^T
            pl.BlockSpec((D, D), lambda i: (0, 0)),              # Wg2^T
            pl.BlockSpec((1, D), lambda i: (0, 0)),              # Wg0
            pl.BlockSpec((1, D), lambda i: (0, 0)),              # bias_alpha
        ],
        out_specs=pl.BlockSpec((TB, Dv), lambda i: (i, 0)),
        compiler_params=pltpu.CompilerParams(
            dimension_semantics=("parallel",),   # batch tiles are independent
            vmem_limit_bytes=vmem_limit),
    )(scal, ct, c, xv, mask2, wg1T, wg2T, wg0, bias)

    return out2d[:B].reshape(B, 1, Dv)


# ------------------------- pure-JAX reference -------------------------

def _entmax_bisect_ref(x, alpha, axis, n_iter=50):
    alpha = jnp.float32(alpha)
    am1 = alpha - 1.0
    X = x * am1
    d = x.shape[axis]
    max_val = jnp.max(X, axis=axis, keepdims=True)
    tau_lo = max_val - 1.0
    tau_hi = max_val - (1.0 / d) ** am1
    p_lo = jnp.maximum(X - tau_lo, 0.0) ** (1.0 / am1)
    f_lo = jnp.sum(p_lo, axis=axis, keepdims=True) - 1.0
    dm = tau_hi - tau_lo
    p_m = p_lo
    for _ in range(n_iter):
        dm = dm * 0.5
        tau_m = tau_lo + dm
        p_m = jnp.maximum(X - tau_m, 0.0) ** (1.0 / am1)
        f_m = jnp.sum(p_m, axis=axis, keepdims=True) - 1.0
        tau_lo = jnp.where((f_m * f_lo) >= 0.0, tau_m, tau_lo)
    return p_m / jnp.sum(p_m, axis=axis, keepdims=True)


def g_att_reference(params, C_target, C, X, alpha, mask):
    q = C_target[:, None, :]                                   # (B,1,D)
    h = jnp.maximum(C @ params["Wg1"].T + q @ params["Wg2"].T
                    + params["bias_alpha"], 0.0)
    s = h @ params["Wg0"].T                                    # (B,S,1)
    s = jnp.where(mask[..., None] == 0, -jnp.inf, s)
    p = _entmax_bisect_ref(s, alpha, axis=1)                   # (B,S,1)
    return jnp.einsum("bsq,bsv->bqv", p, X)                    # (B,1,Dv)


if __name__ == "__main__":
    emb_size = 16
    B, S = 2, 8
    D = 2 * emb_size       # 32
    Dv = 2 * emb_size      # 32
    alpha = 1.5

    key = jax.random.PRNGKey(0)
    k1, k2, k3, k4, k5, k6, k7 = jax.random.split(key, 7)

    params = {
        "Wg1": 0.1 * jax.random.normal(k1, (D, D), jnp.float32),
        "Wg2": 0.1 * jax.random.normal(k2, (D, D), jnp.float32),
        "Wg0": 0.1 * jax.random.normal(k3, (1, D), jnp.float32),
        "bias_alpha": 0.1 * jax.random.normal(k4, (D,), jnp.float32),
    }

    C_target = jax.random.normal(k5, (B, D), jnp.float32)
    C = jax.random.normal(k6, (B, S, D), jnp.float32)
    X = jax.random.normal(k7, (B, S, Dv), jnp.float32)
    lengths = jnp.array([6, 8], jnp.int32)
    mask = (jnp.arange(S)[None, :] < lengths[:, None]).astype(jnp.int32)  # (B,S)

    out = g_att_forward(params, C_target, C, X, alpha, mask)
    out = jax.block_until_ready(out)

    ref = g_att_reference(params, C_target, C, X, alpha, mask)
    assert out.shape == (B, 1, Dv), out.shape
    assert bool(jnp.all(jnp.isfinite(out)))
    err = float(jnp.max(jnp.abs(out - ref)))
    # bf16 MXU operands -> slightly looser tolerance than a pure-f32 kernel.
    assert jnp.allclose(out, ref, atol=3e-2, rtol=3e-2), err

    print("KERNEL_OK")
</pallas_src>

<mosaic_0001>
module attributes {stable_mosaic.version = 11 : i64} {
  func.func @_g_att_kernel(%arg0: i32, %arg1: memref<3xf32, #tpu.memory_space<smem>>, %arg2: memref<8x32xbf16, #tpu.memory_space<vmem>>, %arg3: memref<8x8x32xbf16, #tpu.memory_space<vmem>>, %arg4: memref<8x8x32xbf16, #tpu.memory_space<vmem>>, %arg5: memref<8x8xi32, #tpu.memory_space<vmem>>, %arg6: memref<32x32xbf16, #tpu.memory_space<vmem>>, %arg7: memref<32x32xbf16, #tpu.memory_space<vmem>>, %arg8: memref<1x32xf32, #tpu.memory_space<vmem>>, %arg9: memref<1x32xf32, #tpu.memory_space<vmem>>, %arg10: memref<8x32xf32, #tpu.memory_space<vmem>>) attributes {dimension_semantics = [#tpu.dimension_semantics<parallel>], iteration_bounds = array<i64: 1>, scalar_prefetch = 0 : i64, scratch_operands = 0 : i64, tpu.core_type = #tpu.core_type<tc>, window_params = [{transform_indices = @transform_0, window_bounds = array<i64: 3>}, {transform_indices = @transform_1, window_bounds = array<i64: 8, 32>}, {transform_indices = @transform_2, window_bounds = array<i64: 8, 8, 32>}, {transform_indices = @transform_3, window_bounds = array<i64: 8, 8, 32>}, {transform_indices = @transform_4, window_bounds = array<i64: 8, 8>}, {pipeline_mode = #tpu.pipeline_mode<synchronous>, transform_indices = @transform_5, window_bounds = array<i64: 32, 32>}, {pipeline_mode = #tpu.pipeline_mode<synchronous>, transform_indices = @transform_6, window_bounds = array<i64: 32, 32>}, {pipeline_mode = #tpu.pipeline_mode<synchronous>, transform_indices = @transform_7, window_bounds = array<i64: 1, 32>}, {pipeline_mode = #tpu.pipeline_mode<synchronous>, transform_indices = @transform_8, window_bounds = array<i64: 1, 32>}, {transform_indices = @transform_9, window_bounds = array<i64: 8, 32>}]} {
    %c0 = arith.constant 0 : index
    %0 = memref.load %arg1[%c0] : memref<3xf32, #tpu.memory_space<smem>>
    %c2 = arith.constant 2 : index
    %1 = memref.load %arg1[%c2] : memref<3xf32, #tpu.memory_space<smem>>
    %c0_0 = arith.constant 0 : index
    %c0_1 = arith.constant 0 : index
    %2 = vector.load %arg2[%c0_0, %c0_1] : memref<8x32xbf16, #tpu.memory_space<vmem>>, vector<8x32xbf16>
    %c0_2 = arith.constant 0 : index
    %c0_3 = arith.constant 0 : index
    %3 = vector.load %arg7[%c0_2, %c0_3] : memref<32x32xbf16, #tpu.memory_space<vmem>>, vector<32x32xbf16>
    %cst = arith.constant dense<0.000000e+00> : vector<8x32xf32>
    %4 = tpu.matmul %2, %3, %cst {dimension_numbers = #tpu.dot_dimension_numbers<[1], [0], [0], [1], [0, 0, 1, 1], [], []>} : vector<8x32xbf16>, vector<32x32xbf16>, vector<8x32xf32> -> vector<8x32xf32>
    %c0_4 = arith.constant 0 : index
    %c0_5 = arith.constant 0 : index
    %5 = vector.load %arg9[%c0_4, %c0_5] : memref<1x32xf32, #tpu.memory_space<vmem>>, vector<1x32xf32>
    %6 = vector.broadcast %5 : vector<1x32xf32> to vector<8x32xf32>
    %7 = arith.addf %4, %6 : vector<8x32xf32>
    %c0_6 = arith.constant 0 : index
    %c0_7 = arith.constant 0 : index
    %c0_8 = arith.constant 0 : index
    %8 = vector.load %arg3[%c0_6, %c0_7, %c0_8] : memref<8x8x32xbf16, #tpu.memory_space<vmem>>, vector<8x8x32xbf16>
    %9 = vector.shape_cast %8 : vector<8x8x32xbf16> to vector<64x32xbf16>
    %c0_9 = arith.constant 0 : index
    %c0_10 = arith.constant 0 : index
    %10 = vector.load %arg6[%c0_9, %c0_10] : memref<32x32xbf16, #tpu.memory_space<vmem>>, vector<32x32xbf16>
    %cst_11 = arith.constant dense<0.000000e+00> : vector<64x32xf32>
    %11 = tpu.matmul %9, %10, %cst_11 {dimension_numbers = #tpu.dot_dimension_numbers<[1], [0], [0], [1], [0, 0, 1, 1], [], []>} : vector<64x32xbf16>, vector<32x32xbf16>, vector<64x32xf32> -> vector<64x32xf32>
    %12 = vector.shape_cast %11 : vector<64x32xf32> to vector<8x8x32xf32>
    %13 = vector.shape_cast %7 : vector<8x32xf32> to vector<8x1x32xf32>
    %14 = vector.broadcast %13 : vector<8x1x32xf32> to vector<8x8x32xf32>
    %15 = arith.addf %12, %14 : vector<8x8x32xf32>
    %cst_12 = arith.constant 0.000000e+00 : f32
    %16 = vector.broadcast %cst_12 : f32 to vector<8x8x32xf32>
    %17 = arith.maximumf %15, %16 : vector<8x8x32xf32>
    %c0_13 = arith.constant 0 : index
    %c0_14 = arith.constant 0 : index
    %18 = vector.load %arg8[%c0_13, %c0_14] : memref<1x32xf32, #tpu.memory_space<vmem>>, vector<1x32xf32>
    %19 = vector.shape_cast %18 : vector<1x32xf32> to vector<1x1x32xf32>
    %20 = vector.broadcast %19 : vector<1x1x32xf32> to vector<8x8x32xf32>
    %21 = arith.mulf %17, %20 : vector<8x8x32xf32>
    %cst_15 = arith.constant dense<0.000000e+00> : vector<8x8xf32>
    %22 = vector.multi_reduction <add>, %21, %cst_15 [2] : vector<8x8x32xf32> to vector<8x8xf32>
    %c0_16 = arith.constant 0 : index
    %c0_17 = arith.constant 0 : index
    %23 = vector.load %arg5[%c0_16, %c0_17] : memref<8x8xi32, #tpu.memory_space<vmem>>, vector<8x8xi32>
    %c0_i32 = arith.constant 0 : i32
    %24 = vector.broadcast %c0_i32 : i32 to vector<8x8xi32>
    %25 = arith.cmpi eq, %23, %24 : vector<8x8xi32>
    %cst_18 = arith.constant 0xFF800000 : f32
    %26 = vector.broadcast %cst_18 : f32 to vector<8x8xf32>
    %27 = arith.select %25, %26, %22 : vector<8x8xi1>, vector<8x8xf32>
    %28 = vector.broadcast %0 : f32 to vector<8x8xf32>
    %29 = arith.mulf %27, %28 : vector<8x8xf32>
    %cst_19 = arith.constant dense<0xFF800000> : vector<8xf32>
    %30 = vector.multi_reduction <maximumf>, %29, %cst_19 [1] : vector<8x8xf32> to vector<8xf32>
    %31 = vector.shape_cast %30 : vector<8xf32> to vector<8x1xf32>
    %cst_20 = arith.constant 1.000000e+00 : f32
    %32 = vector.broadcast %cst_20 : f32 to vector<8x1xf32>
    %33 = arith.subf %31, %32 : vector<8x1xf32>
    %34 = vector.broadcast %1 : f32 to vector<8x1xf32>
    %35 = arith.subf %31, %34 : vector<8x1xf32>
    %36 = vector.broadcast %33 : vector<8x1xf32> to vector<8x8xf32>
    %37 = arith.subf %29, %36 : vector<8x8xf32>
    %cst_21 = arith.constant 0.000000e+00 : f32
    %38 = vector.broadcast %cst_21 : f32 to vector<8x8xf32>
    %39 = arith.maximumf %37, %38 : vector<8x8xf32>
    %40 = arith.mulf %39, %39 : vector<8x8xf32>
    %cst_22 = arith.constant dense<0.000000e+00> : vector<8xf32>
    %41 = vector.multi_reduction <add>, %40, %cst_22 [1] : vector<8x8xf32> to vector<8xf32>
    %42 = vector.shape_cast %41 : vector<8xf32> to vector<8x1xf32>
    %cst_23 = arith.constant 1.000000e+00 : f32
    %43 = vector.broadcast %cst_23 : f32 to vector<8x1xf32>
    %44 = arith.subf %42, %43 : vector<8x1xf32>
    %45 = arith.subf %35, %33 : vector<8x1xf32>
    %cst_24 = arith.constant 5.000000e-01 : f32
    %46 = vector.broadcast %cst_24 : f32 to vector<8x1xf32>
    %47 = arith.mulf %45, %46 : vector<8x1xf32>
    %48 = arith.addf %33, %47 : vector<8x1xf32>
    %49 = vector.broadcast %48 : vector<8x1xf32> to vector<8x8xf32>
    %50 = arith.subf %29, %49 : vector<8x8xf32>
    %cst_25 = arith.constant 0.000000e+00 : f32
    %51 = vector.broadcast %cst_25 : f32 to vector<8x8xf32>
    %52 = arith.maximumf %50, %51 : vector<8x8xf32>
    %53 = arith.mulf %52, %52 : vector<8x8xf32>
    %cst_26 = arith.constant dense<0.000000e+00> : vector<8xf32>
    %54 = vector.multi_reduction <add>, %53, %cst_26 [1] : vector<8x8xf32> to vector<8xf32>
    %55 = vector.shape_cast %54 : vector<8xf32> to vector<8x1xf32>
    %cst_27 = arith.constant 1.000000e+00 : f32
    %56 = vector.broadcast %cst_27 : f32 to vector<8x1xf32>
    %57 = arith.subf %55, %56 : vector<8x1xf32>
    %58 = arith.mulf %57, %44 : vector<8x1xf32>
    %cst_28 = arith.constant 0.000000e+00 : f32
    %59 = vector.broadcast %cst_28 : f32 to vector<8x1xf32>
    %60 = arith.cmpf oge, %58, %59 : vector<8x1xf32>
    %61 = arith.select %60, %48, %33 : vector<8x1xi1>, vector<8x1xf32>
    %cst_29 = arith.constant 5.000000e-01 : f32
    %62 = vector.broadcast %cst_29 : f32 to vector<8x1xf32>
    %63 = arith.mulf %47, %62 : vector<8x1xf32>
    %64 = arith.addf %61, %63 : vector<8x1xf32>
    %65 = vector.broadcast %64 : vector<8x1xf32> to vector<8x8xf32>
    %66 = arith.subf %29, %65 : vector<8x8xf32>
    %cst_30 = arith.constant 0.000000e+00 : f32
    %67 = vector.broadcast %cst_30 : f32 to vector<8x8xf32>
    %68 = arith.maximumf %66, %67 : vector<8x8xf32>
    %69 = arith.mulf %68, %68 : vector<8x8xf32>
    %cst_31 = arith.constant dense<0.000000e+00> : vector<8xf32>
    %70 = vector.multi_reduction <add>, %69, %cst_31 [1] : vector<8x8xf32> to vector<8xf32>
    %71 = vector.shape_cast %70 : vector<8xf32> to vector<8x1xf32>
    %cst_32 = arith.constant 1.000000e+00 : f32
    %72 = vector.broadcast %cst_32 : f32 to vector<8x1xf32>
    %73 = arith.subf %71, %72 : vector<8x1xf32>
    %74 = arith.mulf %73, %44 : vector<8x1xf32>
    %cst_33 = arith.constant 0.000000e+00 : f32
    %75 = vector.broadcast %cst_33 : f32 to vector<8x1xf32>
    %76 = arith.cmpf oge, %74, %75 : vector<8x1xf32>
    %77 = arith.select %76, %64, %61 : vector<8x1xi1>, vector<8x1xf32>
    %cst_34 = arith.constant 5.000000e-01 : f32
    %78 = vector.broadcast %cst_34 : f32 to vector<8x1xf32>
    %79 = arith.mulf %63, %78 : vector<8x1xf32>
    %80 = arith.addf %77, %79 : vector<8x1xf32>
    %81 = vector.broadcast %80 : vector<8x1xf32> to vector<8x8xf32>
    %82 = arith.subf %29, %81 : vector<8x8xf32>
    %cst_35 = arith.constant 0.000000e+00 : f32
    %83 = vector.broadcast %cst_35 : f32 to vector<8x8xf32>
    %84 = arith.maximumf %82, %83 : vector<8x8xf32>
    %85 = arith.mulf %84, %84 : vector<8x8xf32>
    %cst_36 = arith.constant dense<0.000000e+00> : vector<8xf32>
    %86 = vector.multi_reduction <add>, %85, %cst_36 [1] : vector<8x8xf32> to vector<8xf32>
    %87 = vector.shape_cast %86 : vector<8xf32> to vector<8x1xf32>
    %cst_37 = arith.constant 1.000000e+00 : f32
    %88 = vector.broadcast %cst_37 : f32 to vector<8x1xf32>
    %89 = arith.subf %87, %88 : vector<8x1xf32>
    %90 = arith.mulf %89, %44 : vector<8x1xf32>
    %cst_38 = arith.constant 0.000000e+00 : f32
    %91 = vector.broadcast %cst_38 : f32 to vector<8x1xf32>
    %92 = arith.cmpf oge, %90, %91 : vector<8x1xf32>
    %93 = arith.select %92, %80, %77 : vector<8x1xi1>, vector<8x1xf32>
    %cst_39 = arith.constant 5.000000e-01 : f32
    %94 = vector.broadcast %cst_39 : f32 to vector<8x1xf32>
    %95 = arith.mulf %79, %94 : vector<8x1xf32>
    %96 = arith.addf %93, %95 : vector<8x1xf32>
    %97 = vector.broadcast %96 : vector<8x1xf32> to vector<8x8xf32>
    %98 = arith.subf %29, %97 : vector<8x8xf32>
    %cst_40 = arith.constant 0.000000e+00 : f32
    %99 = vector.broadcast %cst_40 : f32 to vector<8x8xf32>
    %100 = arith.maximumf %98, %99 : vector<8x8xf32>
    %101 = arith.mulf %100, %100 : vector<8x8xf32>
    %cst_41 = arith.constant dense<0.000000e+00> : vector<8xf32>
    %102 = vector.multi_reduction <add>, %101, %cst_41 [1] : vector<8x8xf32> to vector<8xf32>
    %103 = vector.shape_cast %102 : vector<8xf32> to vector<8x1xf32>
    %cst_42 = arith.constant 1.000000e+00 : f32
    %104 = vector.broadcast %cst_42 : f32 to vector<8x1xf32>
    %105 = arith.subf %103, %104 : vector<8x1xf32>
    %106 = arith.mulf %105, %44 : vector<8x1xf32>
    %cst_43 = arith.constant 0.000000e+00 : f32
    %107 = vector.broadcast %cst_43 : f32 to vector<8x1xf32>
    %108 = arith.cmpf oge, %106, %107 : vector<8x1xf32>
    %109 = arith.select %108, %96, %93 : vector<8x1xi1>, vector<8x1xf32>
    %cst_44 = arith.constant 5.000000e-01 : f32
    %110 = vector.broadcast %cst_44 : f32 to vector<8x1xf32>
    %111 = arith.mulf %95, %110 : vector<8x1xf32>
    %112 = arith.addf %109, %111 : vector<8x1xf32>
    %113 = vector.broadcast %112 : vector<8x1xf32> to vector<8x8xf32>
    %114 = arith.subf %29, %113 : vector<8x8xf32>
    %cst_45 = arith.constant 0.000000e+00 : f32
    %115 = vector.broadcast %cst_45 : f32 to vector<8x8xf32>
    %116 = arith.maximumf %114, %115 : vector<8x8xf32>
    %117 = arith.mulf %116, %116 : vector<8x8xf32>
    %cst_46 = arith.constant dense<0.000000e+00> : vector<8xf32>
    %118 = vector.multi_reduction <add>, %117, %cst_46 [1] : vector<8x8xf32> to vector<8xf32>
    %119 = vector.shape_cast %118 : vector<8xf32> to vector<8x1xf32>
    %cst_47 = arith.constant 1.000000e+00 : f32
    %120 = vector.broadcast %cst_47 : f32 to vector<8x1xf32>
    %121 = arith.subf %119, %120 : vector<8x1xf32>
    %122 = arith.mulf %121, %44 : vector<8x1xf32>
    %cst_48 = arith.constant 0.000000e+00 : f32
    %123 = vector.broadcast %cst_48 : f32 to vector<8x1xf32>
    %124 = arith.cmpf oge, %122, %123 : vector<8x1xf32>
    %125 = arith.select %124, %112, %109 : vector<8x1xi1>, vector<8x1xf32>
    %cst_49 = arith.constant 5.000000e-01 : f32
    %126 = vector.broadcast %cst_49 : f32 to vector<8x1xf32>
    %127 = arith.mulf %111, %126 : vector<8x1xf32>
    %128 = arith.addf %125, %127 : vector<8x1xf32>
    %129 = vector.broadcast %128 : vector<8x1xf32> to vector<8x8xf32>
    %130 = arith.subf %29, %129 : vector<8x8xf32>
    %cst_50 = arith.constant 0.000000e+00 : f32
    %131 = vector.broadcast %cst_50 : f32 to vector<8x8xf32>
    %132 = arith.maximumf %130, %131 : vector<8x8xf32>
    %133 = arith.mulf %132, %132 : vector<8x8xf32>
    %cst_51 = arith.constant dense<0.000000e+00> : vector<8xf32>
    %134 = vector.multi_reduction <add>, %133, %cst_51 [1] : vector<8x8xf32> to vector<8xf32>
    %135 = vector.shape_cast %134 : vector<8xf32> to vector<8x1xf32>
    %cst_52 = arith.constant 1.000000e+00 : f32
    %136 = vector.broadcast %cst_52 : f32 to vector<8x1xf32>
    %137 = arith.subf %135, %136 : vector<8x1xf32>
    %138 = arith.mulf %137, %44 : vector<8x1xf32>
    %cst_53 = arith.constant 0.000000e+00 : f32
    %139 = vector.broadcast %cst_53 : f32 to vector<8x1xf32>
    %140 = arith.cmpf oge, %138, %139 : vector<8x1xf32>
    %141 = arith.select %140, %128, %125 : vector<8x1xi1>, vector<8x1xf32>
    %cst_54 = arith.constant 5.000000e-01 : f32
    %142 = vector.broadcast %cst_54 : f32 to vector<8x1xf32>
    %143 = arith.mulf %127, %142 : vector<8x1xf32>
    %144 = arith.addf %141, %143 : vector<8x1xf32>
    %145 = vector.broadcast %144 : vector<8x1xf32> to vector<8x8xf32>
    %146 = arith.subf %29, %145 : vector<8x8xf32>
    %cst_55 = arith.constant 0.000000e+00 : f32
    %147 = vector.broadcast %cst_55 : f32 to vector<8x8xf32>
    %148 = arith.maximumf %146, %147 : vector<8x8xf32>
    %149 = arith.mulf %148, %148 : vector<8x8xf32>
    %cst_56 = arith.constant dense<0.000000e+00> : vector<8xf32>
    %150 = vector.multi_reduction <add>, %149, %cst_56 [1] : vector<8x8xf32> to vector<8xf32>
    %151 = vector.shape_cast %150 : vector<8xf32> to vector<8x1xf32>
    %cst_57 = arith.constant 1.000000e+00 : f32
    %152 = vector.broadcast %cst_57 : f32 to vector<8x1xf32>
    %153 = arith.subf %151, %152 : vector<8x1xf32>
    %154 = arith.mulf %153, %44 : vector<8x1xf32>
    %cst_58 = arith.constant 0.000000e+00 : f32
    %155 = vector.broadcast %cst_58 : f32 to vector<8x1xf32>
    %156 = arith.cmpf oge, %154, %155 : vector<8x1xf32>
    %157 = arith.select %156, %144, %141 : vector<8x1xi1>, vector<8x1xf32>
    %cst_59 = arith.constant 5.000000e-01 : f32
    %158 = vector.broadcast %cst_59 : f32 to vector<8x1xf32>
    %159 = arith.mulf %143, %158 : vector<8x1xf32>
    %160 = arith.addf %157, %159 : vector<8x1xf32>
    %161 = vector.broadcast %160 : vector<8x1xf32> to vector<8x8xf32>
    %162 = arith.subf %29, %161 : vector<8x8xf32>
    %cst_60 = arith.constant 0.000000e+00 : f32
    %163 = vector.broadcast %cst_60 : f32 to vector<8x8xf32>
    %164 = arith.maximumf %162, %163 : vector<8x8xf32>
    %165 = arith.mulf %164, %164 : vector<8x8xf32>
    %cst_61 = arith.constant dense<0.000000e+00> : vector<8xf32>
    %166 = vector.multi_reduction <add>, %165, %cst_61 [1] : vector<8x8xf32> to vector<8xf32>
    %167 = vector.shape_cast %166 : vector<8xf32> to vector<8x1xf32>
    %cst_62 = arith.constant 1.000000e+00 : f32
    %168 = vector.broadcast %cst_62 : f32 to vector<8x1xf32>
    %169 = arith.subf %167, %168 : vector<8x1xf32>
    %170 = arith.mulf %169, %44 : vector<8x1xf32>
    %cst_63 = arith.constant 0.000000e+00 : f32
    %171 = vector.broadcast %cst_63 : f32 to vector<8x1xf32>
    %172 = arith.cmpf oge, %170, %171 : vector<8x1xf32>
    %173 = arith.select %172, %160, %157 : vector<8x1xi1>, vector<8x1xf32>
    %cst_64 = arith.constant 5.000000e-01 : f32
    %174 = vector.broadcast %cst_64 : f32 to vector<8x1xf32>
    %175 = arith.mulf %159, %174 : vector<8x1xf32>
    %176 = arith.addf %173, %175 : vector<8x1xf32>
    %177 = vector.broadcast %176 : vector<8x1xf32> to vector<8x8xf32>
    %178 = arith.subf %29, %177 : vector<8x8xf32>
    %cst_65 = arith.constant 0.000000e+00 : f32
    %179 = vector.broadcast %cst_65 : f32 to vector<8x8xf32>
    %180 = arith.maximumf %178, %179 : vector<8x8xf32>
    %181 = arith.mulf %180, %180 : vector<8x8xf32>
    %cst_66 = arith.constant dense<0.000000e+00> : vector<8xf32>
    %182 = vector.multi_reduction <add>, %181, %cst_66 [1] : vector<8x8xf32> to vector<8xf32>
    %183 = vector.shape_cast %182 : vector<8xf32> to vector<8x1xf32>
    %cst_67 = arith.constant 1.000000e+00 : f32
    %184 = vector.broadcast %cst_67 : f32 to vector<8x1xf32>
    %185 = arith.subf %183, %184 : vector<8x1xf32>
    %186 = arith.mulf %185, %44 : vector<8x1xf32>
    %cst_68 = arith.constant 0.000000e+00 : f32
    %187 = vector.broadcast %cst_68 : f32 to vector<8x1xf32>
    %188 = arith.cmpf oge, %186, %187 : vector<8x1xf32>
    %189 = arith.select %188, %176, %173 : vector<8x1xi1>, vector<8x1xf32>
    %cst_69 = arith.constant 5.000000e-01 : f32
    %190 = vector.broadcast %cst_69 : f32 to vector<8x1xf32>
    %191 = arith.mulf %175, %190 : vector<8x1xf32>
    %192 = arith.addf %189, %191 : vector<8x1xf32>
    %193 = vector.broadcast %192 : vector<8x1xf32> to vector<8x8xf32>
    %194 = arith.subf %29, %193 : vector<8x8xf32>
    %cst_70 = arith.constant 0.000000e+00 : f32
    %195 = vector.broadcast %cst_70 : f32 to vector<8x8xf32>
    %196 = arith.maximumf %194, %195 : vector<8x8xf32>
    %197 = arith.mulf %196, %196 : vector<8x8xf32>
    %cst_71 = arith.constant dense<0.000000e+00> : vector<8xf32>
    %198 = vector.multi_reduction <add>, %197, %cst_71 [1] : vector<8x8xf32> to vector<8xf32>
    %199 = vector.shape_cast %198 : vector<8xf32> to vector<8x1xf32>
    %cst_72 = arith.constant 1.000000e+00 : f32
    %200 = vector.broadcast %cst_72 : f32 to vector<8x1xf32>
    %201 = arith.subf %199, %200 : vector<8x1xf32>
    %202 = arith.mulf %201, %44 : vector<8x1xf32>
    %cst_73 = arith.constant 0.000000e+00 : f32
    %203 = vector.broadcast %cst_73 : f32 to vector<8x1xf32>
    %204 = arith.cmpf oge, %202, %203 : vector<8x1xf32>
    %205 = arith.select %204, %192, %189 : vector<8x1xi1>, vector<8x1xf32>
    %cst_74 = arith.constant 5.000000e-01 : f32
    %206 = vector.broadcast %cst_74 : f32 to vector<8x1xf32>
    %207 = arith.mulf %191, %206 : vector<8x1xf32>
    %208 = arith.addf %205, %207 : vector<8x1xf32>
    %209 = vector.broadcast %208 : vector<8x1xf32> to vector<8x8xf32>
    %210 = arith.subf %29, %209 : vector<8x8xf32>
    %cst_75 = arith.constant 0.000000e+00 : f32
    %211 = vector.broadcast %cst_75 : f32 to vector<8x8xf32>
    %212 = arith.maximumf %210, %211 : vector<8x8xf32>
    %213 = arith.mulf %212, %212 : vector<8x8xf32>
    %cst_76 = arith.constant dense<0.000000e+00> : vector<8xf32>
    %214 = vector.multi_reduction <add>, %213, %cst_76 [1] : vector<8x8xf32> to vector<8xf32>
    %215 = vector.shape_cast %214 : vector<8xf32> to vector<8x1xf32>
    %cst_77 = arith.constant 1.000000e+00 : f32
    %216 = vector.broadcast %cst_77 : f32 to vector<8x1xf32>
    %217 = arith.subf %215, %216 : vector<8x1xf32>
    %218 = arith.mulf %217, %44 : vector<8x1xf32>
    %cst_78 = arith.constant 0.000000e+00 : f32
    %219 = vector.broadcast %cst_78 : f32 to vector<8x1xf32>
    %220 = arith.cmpf oge, %218, %219 : vector<8x1xf32>
    %221 = arith.select %220, %208, %205 : vector<8x1xi1>, vector<8x1xf32>
    %cst_79 = arith.constant 5.000000e-01 : f32
    %222 = vector.broadcast %cst_79 : f32 to vector<8x1xf32>
    %223 = arith.mulf %207, %222 : vector<8x1xf32>
    %224 = arith.addf %221, %223 : vector<8x1xf32>
    %225 = vector.broadcast %224 : vector<8x1xf32> to vector<8x8xf32>
    %226 = arith.subf %29, %225 : vector<8x8xf32>
    %cst_80 = arith.constant 0.000000e+00 : f32
    %227 = vector.broadcast %cst_80 : f32 to vector<8x8xf32>
    %228 = arith.maximumf %226, %227 : vector<8x8xf32>
    %229 = arith.mulf %228, %228 : vector<8x8xf32>
    %cst_81 = arith.constant dense<0.000000e+00> : vector<8xf32>
    %230 = vector.multi_reduction <add>, %229, %cst_81 [1] : vector<8x8xf32> to vector<8xf32>
    %231 = vector.shape_cast %230 : vector<8xf32> to vector<8x1xf32>
    %cst_82 = arith.constant 1.000000e+00 : f32
    %232 = vector.broadcast %cst_82 : f32 to vector<8x1xf32>
    %233 = arith.subf %231, %232 : vector<8x1xf32>
    %234 = arith.mulf %233, %44 : vector<8x1xf32>
    %cst_83 = arith.constant 0.000000e+00 : f32
    %235 = vector.broadcast %cst_83 : f32 to vector<8x1xf32>
    %236 = arith.cmpf oge, %234, %235 : vector<8x1xf32>
    %237 = arith.select %236, %224, %221 : vector<8x1xi1>, vector<8x1xf32>
    %cst_84 = arith.constant 5.000000e-01 : f32
    %238 = vector.broadcast %cst_84 : f32 to vector<8x1xf32>
    %239 = arith.mulf %223, %238 : vector<8x1xf32>
    %240 = arith.addf %237, %239 : vector<8x1xf32>
    %241 = vector.broadcast %240 : vector<8x1xf32> to vector<8x8xf32>
    %242 = arith.subf %29, %241 : vector<8x8xf32>
    %cst_85 = arith.constant 0.000000e+00 : f32
    %243 = vector.broadcast %cst_85 : f32 to vector<8x8xf32>
    %244 = arith.maximumf %242, %243 : vector<8x8xf32>
    %245 = arith.mulf %244, %244 : vector<8x8xf32>
    %cst_86 = arith.constant dense<0.000000e+00> : vector<8xf32>
    %246 = vector.multi_reduction <add>, %245, %cst_86 [1] : vector<8x8xf32> to vector<8xf32>
    %247 = vector.shape_cast %246 : vector<8xf32> to vector<8x1xf32>
    %cst_87 = arith.constant 1.000000e+00 : f32
    %248 = vector.broadcast %cst_87 : f32 to vector<8x1xf32>
    %249 = arith.subf %247, %248 : vector<8x1xf32>
    %250 = arith.mulf %249, %44 : vector<8x1xf32>
    %cst_88 = arith.constant 0.000000e+00 : f32
    %251 = vector.broadcast %cst_88 : f32 to vector<8x1xf32>
    %252 = arith.cmpf oge, %250, %251 : vector<8x1xf32>
    %253 = arith.select %252, %240, %237 : vector<8x1xi1>, vector<8x1xf32>
    %cst_89 = arith.constant 5.000000e-01 : f32
    %254 = vector.broadcast %cst_89 : f32 to vector<8x1xf32>
    %255 = arith.mulf %239, %254 : vector<8x1xf32>
    %256 = arith.addf %253, %255 : vector<8x1xf32>
    %257 = vector.broadcast %256 : vector<8x1xf32> to vector<8x8xf32>
    %258 = arith.subf %29, %257 : vector<8x8xf32>
    %cst_90 = arith.constant 0.000000e+00 : f32
    %259 = vector.broadcast %cst_90 : f32 to vector<8x8xf32>
    %260 = arith.maximumf %258, %259 : vector<8x8xf32>
    %261 = arith.mulf %260, %260 : vector<8x8xf32>
    %cst_91 = arith.constant dense<0.000000e+00> : vector<8xf32>
    %262 = vector.multi_reduction <add>, %261, %cst_91 [1] : vector<8x8xf32> to vector<8xf32>
    %263 = vector.shape_cast %262 : vector<8xf32> to vector<8x1xf32>
    %cst_92 = arith.constant 1.000000e+00 : f32
    %264 = vector.broadcast %cst_92 : f32 to vector<8x1xf32>
    %265 = arith.subf %263, %264 : vector<8x1xf32>
    %266 = arith.mulf %265, %44 : vector<8x1xf32>
    %cst_93 = arith.constant 0.000000e+00 : f32
    %267 = vector.broadcast %cst_93 : f32 to vector<8x1xf32>
    %268 = arith.cmpf oge, %266, %267 : vector<8x1xf32>
    %269 = arith.select %268, %256, %253 : vector<8x1xi1>, vector<8x1xf32>
    %cst_94 = arith.constant 5.000000e-01 : f32
    %270 = vector.broadcast %cst_94 : f32 to vector<8x1xf32>
    %271 = arith.mulf %255, %270 : vector<8x1xf32>
    %272 = arith.addf %269, %271 : vector<8x1xf32>
    %273 = vector.broadcast %272 : vector<8x1xf32> to vector<8x8xf32>
    %274 = arith.subf %29, %273 : vector<8x8xf32>
    %cst_95 = arith.constant 0.000000e+00 : f32
    %275 = vector.broadcast %cst_95 : f32 to vector<8x8xf32>
    %276 = arith.maximumf %274, %275 : vector<8x8xf32>
    %277 = arith.mulf %276, %276 : vector<8x8xf32>
    %cst_96 = arith.constant dense<0.000000e+00> : vector<8xf32>
    %278 = vector.multi_reduction <add>, %277, %cst_96 [1] : vector<8x8xf32> to vector<8xf32>
    %279 = vector.shape_cast %278 : vector<8xf32> to vector<8x1xf32>
    %cst_97 = arith.constant 1.000000e+00 : f32
    %280 = vector.broadcast %cst_97 : f32 to vector<8x1xf32>
    %281 = arith.subf %279, %280 : vector<8x1xf32>
    %282 = arith.mulf %281, %44 : vector<8x1xf32>
    %cst_98 = arith.constant 0.000000e+00 : f32
    %283 = vector.broadcast %cst_98 : f32 to vector<8x1xf32>
    %284 = arith.cmpf oge, %282, %283 : vector<8x1xf32>
    %285 = arith.select %284, %272, %269 : vector<8x1xi1>, vector<8x1xf32>
    %cst_99 = arith.constant 5.000000e-01 : f32
    %286 = vector.broadcast %cst_99 : f32 to vector<8x1xf32>
    %287 = arith.mulf %271, %286 : vector<8x1xf32>
    %288 = arith.addf %285, %287 : vector<8x1xf32>
    %289 = vector.broadcast %288 : vector<8x1xf32> to vector<8x8xf32>
    %290 = arith.subf %29, %289 : vector<8x8xf32>
    %cst_100 = arith.constant 0.000000e+00 : f32
    %291 = vector.broadcast %cst_100 : f32 to vector<8x8xf32>
    %292 = arith.maximumf %290, %291 : vector<8x8xf32>
    %293 = arith.mulf %292, %292 : vector<8x8xf32>
    %cst_101 = arith.constant dense<0.000000e+00> : vector<8xf32>
    %294 = vector.multi_reduction <add>, %293, %cst_101 [1] : vector<8x8xf32> to vector<8xf32>
    %295 = vector.shape_cast %294 : vector<8xf32> to vector<8x1xf32>
    %cst_102 = arith.constant 1.000000e+00 : f32
    %296 = vector.broadcast %cst_102 : f32 to vector<8x1xf32>
    %297 = arith.subf %295, %296 : vector<8x1xf32>
    %298 = arith.mulf %297, %44 : vector<8x1xf32>
    %cst_103 = arith.constant 0.000000e+00 : f32
    %299 = vector.broadcast %cst_103 : f32 to vector<8x1xf32>
    %300 = arith.cmpf oge, %298, %299 : vector<8x1xf32>
    %301 = arith.select %300, %288, %285 : vector<8x1xi1>, vector<8x1xf32>
    %cst_104 = arith.constant 5.000000e-01 : f32
    %302 = vector.broadcast %cst_104 : f32 to vector<8x1xf32>
    %303 = arith.mulf %287, %302 : vector<8x1xf32>
    %304 = arith.addf %301, %303 : vector<8x1xf32>
    %305 = vector.broadcast %304 : vector<8x1xf32> to vector<8x8xf32>
    %306 = arith.subf %29, %305 : vector<8x8xf32>
    %cst_105 = arith.constant 0.000000e+00 : f32
    %307 = vector.broadcast %cst_105 : f32 to vector<8x8xf32>
    %308 = arith.maximumf %306, %307 : vector<8x8xf32>
    %309 = arith.mulf %308, %308 : vector<8x8xf32>
    %cst_106 = arith.constant dense<0.000000e+00> : vector<8xf32>
    %310 = vector.multi_reduction <add>, %309, %cst_106 [1] : vector<8x8xf32> to vector<8xf32>
    %311 = vector.shape_cast %310 : vector<8xf32> to vector<8x1xf32>
    %cst_107 = arith.constant 1.000000e+00 : f32
    %312 = vector.broadcast %cst_107 : f32 to vector<8x1xf32>
    %313 = arith.subf %311, %312 : vector<8x1xf32>
    %314 = arith.mulf %313, %44 : vector<8x1xf32>
    %cst_108 = arith.constant 0.000000e+00 : f32
    %315 = vector.broadcast %cst_108 : f32 to vector<8x1xf32>
    %316 = arith.cmpf oge, %314, %315 : vector<8x1xf32>
    %317 = arith.select %316, %304, %301 : vector<8x1xi1>, vector<8x1xf32>
    %cst_109 = arith.constant 5.000000e-01 : f32
    %318 = vector.broadcast %cst_109 : f32 to vector<8x1xf32>
    %319 = arith.mulf %303, %318 : vector<8x1xf32>
    %320 = arith.addf %317, %319 : vector<8x1xf32>
    %321 = vector.broadcast %320 : vector<8x1xf32> to vector<8x8xf32>
    %322 = arith.subf %29, %321 : vector<8x8xf32>
    %cst_110 = arith.constant 0.000000e+00 : f32
    %323 = vector.broadcast %cst_110 : f32 to vector<8x8xf32>
    %324 = arith.maximumf %322, %323 : vector<8x8xf32>
    %325 = arith.mulf %324, %324 : vector<8x8xf32>
    %cst_111 = arith.constant dense<0.000000e+00> : vector<8xf32>
    %326 = vector.multi_reduction <add>, %325, %cst_111 [1] : vector<8x8xf32> to vector<8xf32>
    %327 = vector.shape_cast %326 : vector<8xf32> to vector<8x1xf32>
    %cst_112 = arith.constant 1.000000e+00 : f32
    %328 = vector.broadcast %cst_112 : f32 to vector<8x1xf32>
    %329 = arith.subf %327, %328 : vector<8x1xf32>
    %330 = arith.mulf %329, %44 : vector<8x1xf32>
    %cst_113 = arith.constant 0.000000e+00 : f32
    %331 = vector.broadcast %cst_113 : f32 to vector<8x1xf32>
    %332 = arith.cmpf oge, %330, %331 : vector<8x1xf32>
    %333 = arith.select %332, %320, %317 : vector<8x1xi1>, vector<8x1xf32>
    %cst_114 = arith.constant 5.000000e-01 : f32
    %334 = vector.broadcast %cst_114 : f32 to vector<8x1xf32>
    %335 = arith.mulf %319, %334 : vector<8x1xf32>
    %336 = arith.addf %333, %335 : vector<8x1xf32>
    %337 = vector.broadcast %336 : vector<8x1xf32> to vector<8x8xf32>
    %338 = arith.subf %29, %337 : vector<8x8xf32>
    %cst_115 = arith.constant 0.000000e+00 : f32
    %339 = vector.broadcast %cst_115 : f32 to vector<8x8xf32>
    %340 = arith.maximumf %338, %339 : vector<8x8xf32>
    %341 = arith.mulf %340, %340 : vector<8x8xf32>
    %cst_116 = arith.constant dense<0.000000e+00> : vector<8xf32>
    %342 = vector.multi_reduction <add>, %341, %cst_116 [1] : vector<8x8xf32> to vector<8xf32>
    %343 = vector.shape_cast %342 : vector<8xf32> to vector<8x1xf32>
    %cst_117 = arith.constant 1.000000e+00 : f32
    %344 = vector.broadcast %cst_117 : f32 to vector<8x1xf32>
    %345 = arith.subf %343, %344 : vector<8x1xf32>
    %346 = arith.mulf %345, %44 : vector<8x1xf32>
    %cst_118 = arith.constant 0.000000e+00 : f32
    %347 = vector.broadcast %cst_118 : f32 to vector<8x1xf32>
    %348 = arith.cmpf oge, %346, %347 : vector<8x1xf32>
    %349 = arith.select %348, %336, %333 : vector<8x1xi1>, vector<8x1xf32>
    %cst_119 = arith.constant 5.000000e-01 : f32
    %350 = vector.broadcast %cst_119 : f32 to vector<8x1xf32>
    %351 = arith.mulf %335, %350 : vector<8x1xf32>
    %352 = arith.addf %349, %351 : vector<8x1xf32>
    %353 = vector.broadcast %352 : vector<8x1xf32> to vector<8x8xf32>
    %354 = arith.subf %29, %353 : vector<8x8xf32>
    %cst_120 = arith.constant 0.000000e+00 : f32
    %355 = vector.broadcast %cst_120 : f32 to vector<8x8xf32>
    %356 = arith.maximumf %354, %355 : vector<8x8xf32>
    %357 = arith.mulf %356, %356 : vector<8x8xf32>
    %cst_121 = arith.constant dense<0.000000e+00> : vector<8xf32>
    %358 = vector.multi_reduction <add>, %357, %cst_121 [1] : vector<8x8xf32> to vector<8xf32>
    %359 = vector.shape_cast %358 : vector<8xf32> to vector<8x1xf32>
    %cst_122 = arith.constant 1.000000e+00 : f32
    %360 = vector.broadcast %cst_122 : f32 to vector<8x1xf32>
    %361 = arith.subf %359, %360 : vector<8x1xf32>
    %362 = arith.mulf %361, %44 : vector<8x1xf32>
    %cst_123 = arith.constant 0.000000e+00 : f32
    %363 = vector.broadcast %cst_123 : f32 to vector<8x1xf32>
    %364 = arith.cmpf oge, %362, %363 : vector<8x1xf32>
    %365 = arith.select %364, %352, %349 : vector<8x1xi1>, vector<8x1xf32>
    %cst_124 = arith.constant 5.000000e-01 : f32
    %366 = vector.broadcast %cst_124 : f32 to vector<8x1xf32>
    %367 = arith.mulf %351, %366 : vector<8x1xf32>
    %368 = arith.addf %365, %367 : vector<8x1xf32>
    %369 = vector.broadcast %368 : vector<8x1xf32> to vector<8x8xf32>
    %370 = arith.subf %29, %369 : vector<8x8xf32>
    %cst_125 = arith.constant 0.000000e+00 : f32
    %371 = vector.broadcast %cst_125 : f32 to vector<8x8xf32>
    %372 = arith.maximumf %370, %371 : vector<8x8xf32>
    %373 = arith.mulf %372, %372 : vector<8x8xf32>
    %cst_126 = arith.constant dense<0.000000e+00> : vector<8xf32>
    %374 = vector.multi_reduction <add>, %373, %cst_126 [1] : vector<8x8xf32> to vector<8xf32>
    %375 = vector.shape_cast %374 : vector<8xf32> to vector<8x1xf32>
    %cst_127 = arith.constant 1.000000e+00 : f32
    %376 = vector.broadcast %cst_127 : f32 to vector<8x1xf32>
    %377 = arith.subf %375, %376 : vector<8x1xf32>
    %378 = arith.mulf %377, %44 : vector<8x1xf32>
    %cst_128 = arith.constant 0.000000e+00 : f32
    %379 = vector.broadcast %cst_128 : f32 to vector<8x1xf32>
    %380 = arith.cmpf oge, %378, %379 : vector<8x1xf32>
    %381 = arith.select %380, %368, %365 : vector<8x1xi1>, vector<8x1xf32>
    %cst_129 = arith.constant 5.000000e-01 : f32
    %382 = vector.broadcast %cst_129 : f32 to vector<8x1xf32>
    %383 = arith.mulf %367, %382 : vector<8x1xf32>
    %384 = arith.addf %381, %383 : vector<8x1xf32>
    %385 = vector.broadcast %384 : vector<8x1xf32> to vector<8x8xf32>
    %386 = arith.subf %29, %385 : vector<8x8xf32>
    %cst_130 = arith.constant 0.000000e+00 : f32
    %387 = vector.broadcast %cst_130 : f32 to vector<8x8xf32>
    %388 = arith.maximumf %386, %387 : vector<8x8xf32>
    %389 = arith.mulf %388, %388 : vector<8x8xf32>
    %cst_131 = arith.constant dense<0.000000e+00> : vector<8xf32>
    %390 = vector.multi_reduction <add>, %389, %cst_131 [1] : vector<8x8xf32> to vector<8xf32>
    %391 = vector.shape_cast %390 : vector<8xf32> to vector<8x1xf32>
    %cst_132 = arith.constant 1.000000e+00 : f32
    %392 = vector.broadcast %cst_132 : f32 to vector<8x1xf32>
    %393 = arith.subf %391, %392 : vector<8x1xf32>
    %394 = arith.mulf %393, %44 : vector<8x1xf32>
    %cst_133 = arith.constant 0.000000e+00 : f32
    %395 = vector.broadcast %cst_133 : f32 to vector<8x1xf32>
    %396 = arith.cmpf oge, %394, %395 : vector<8x1xf32>
    %397 = arith.select %396, %384, %381 : vector<8x1xi1>, vector<8x1xf32>
    %cst_134 = arith.constant 5.000000e-01 : f32
    %398 = vector.broadcast %cst_134 : f32 to vector<8x1xf32>
    %399 = arith.mulf %383, %398 : vector<8x1xf32>
    %400 = arith.addf %397, %399 : vector<8x1xf32>
    %401 = vector.broadcast %400 : vector<8x1xf32> to vector<8x8xf32>
    %402 = arith.subf %29, %401 : vector<8x8xf32>
    %cst_135 = arith.constant 0.000000e+00 : f32
    %403 = vector.broadcast %cst_135 : f32 to vector<8x8xf32>
    %404 = arith.maximumf %402, %403 : vector<8x8xf32>
    %405 = arith.mulf %404, %404 : vector<8x8xf32>
    %cst_136 = arith.constant dense<0.000000e+00> : vector<8xf32>
    %406 = vector.multi_reduction <add>, %405, %cst_136 [1] : vector<8x8xf32> to vector<8xf32>
    %407 = vector.shape_cast %406 : vector<8xf32> to vector<8x1xf32>
    %cst_137 = arith.constant 1.000000e+00 : f32
    %408 = vector.broadcast %cst_137 : f32 to vector<8x1xf32>
    %409 = arith.subf %407, %408 : vector<8x1xf32>
    %410 = arith.mulf %409, %44 : vector<8x1xf32>
    %cst_138 = arith.constant 0.000000e+00 : f32
    %411 = vector.broadcast %cst_138 : f32 to vector<8x1xf32>
    %412 = arith.cmpf oge, %410, %411 : vector<8x1xf32>
    %413 = arith.select %412, %400, %397 : vector<8x1xi1>, vector<8x1xf32>
    %cst_139 = arith.constant 5.000000e-01 : f32
    %414 = vector.broadcast %cst_139 : f32 to vector<8x1xf32>
    %415 = arith.mulf %399, %414 : vector<8x1xf32>
    %416 = arith.addf %413, %415 : vector<8x1xf32>
    %417 = vector.broadcast %416 : vector<8x1xf32> to vector<8x8xf32>
    %418 = arith.subf %29, %417 : vector<8x8xf32>
    %cst_140 = arith.constant 0.000000e+00 : f32
    %419 = vector.broadcast %cst_140 : f32 to vector<8x8xf32>
    %420 = arith.maximumf %418, %419 : vector<8x8xf32>
    %421 = arith.mulf %420, %420 : vector<8x8xf32>
    %cst_141 = arith.constant dense<0.000000e+00> : vector<8xf32>
    %422 = vector.multi_reduction <add>, %421, %cst_141 [1] : vector<8x8xf32> to vector<8xf32>
    %423 = vector.shape_cast %422 : vector<8xf32> to vector<8x1xf32>
    %424 = tpu.reciprocal %423 {approx = true} : vector<8x1xf32> -> vector<8x1xf32>
    %425 = vector.broadcast %424 : vector<8x1xf32> to vector<8x8xf32>
    %426 = arith.mulf %421, %425 : vector<8x8xf32>
    %427 = tpu.iota {dimensions = array<i32: 0>} : vector<8x64xi32>
    %428 = tpu.iota {dimensions = array<i32: 1>} : vector<8x64xi32>
    %c8_i32 = arith.constant 8 : i32
    %429 = vector.broadcast %c8_i32 : i32 to vector<8x64xi32>
    %430 = arith.muli %427, %429 : vector<8x64xi32>
    %431 = tpu.concatenate %426, %426, %426, %426, %426, %426, %426, %426 in 1 : vector<8x8xf32>, vector<8x8xf32>, vector<8x8xf32>, vector<8x8xf32>, vector<8x8xf32>, vector<8x8xf32>, vector<8x8xf32>, vector<8x8xf32> -> vector<8x64xf32>
    %432 = arith.cmpi sge, %428, %430 : vector<8x64xi32>
    %c8_i32_142 = arith.constant 8 : i32
    %433 = vector.broadcast %c8_i32_142 : i32 to vector<8x64xi32>
    %434 = arith.addi %430, %433 : vector<8x64xi32>
    %435 = arith.cmpi slt, %428, %434 : vector<8x64xi32>
    %436 = arith.andi %432, %435 : vector<8x64xi1>
    %cst_143 = arith.constant 0.000000e+00 : f32
    %437 = vector.broadcast %cst_143 : f32 to vector<8x64xf32>
    %438 = arith.select %436, %431, %437 : vector<8x64xi1>, vector<8x64xf32>
    %c0_144 = arith.constant 0 : index
    %c0_145 = arith.constant 0 : index
    %c0_146 = arith.constant 0 : index
    %439 = vector.load %arg4[%c0_144, %c0_145, %c0_146] : memref<8x8x32xbf16, #tpu.memory_space<vmem>>, vector<8x8x32xbf16>
    %440 = vector.shape_cast %439 : vector<8x8x32xbf16> to vector<64x32xbf16>
    %441 = arith.extf %440 : vector<64x32xbf16> to vector<64x32xf32>
    %cst_147 = arith.constant dense<0.000000e+00> : vector<8x32xf32>
    %442 = tpu.matmul %438, %441, %cst_147 {dimension_numbers = #tpu.dot_dimension_numbers<[1], [0], [0], [1], [0, 0, 1, 1], [], []>} : vector<8x64xf32>, vector<64x32xf32>, vector<8x32xf32> -> vector<8x32xf32>
    %c0_148 = arith.constant 0 : index
    %c0_149 = arith.constant 0 : index
    %443 = vector.load %arg10[%c0_148, %c0_149] : memref<8x32xf32, #tpu.memory_space<vmem>>, vector<8x32xf32>
    tpu.vector_store %arg10[%c0_148, %c0_149], %442 {strides = array<i32>} : memref<8x32xf32, #tpu.memory_space<vmem>>, vector<8x32xf32>,
    return
  }
  func.func @transform_0(%arg0: i32) -> i32 {
    %c0_i32 = arith.constant 0 : i32
    %c0_i32_0 = arith.constant 0 : i32
    return %c0_i32 : i32
  }
  func.func @transform_1(%arg0: i32) -> (i32, i32) {
    %c0_i32 = arith.constant 0 : i32
    %c0_i32_0 = arith.constant 0 : i32
    return %arg0, %c0_i32 : i32, i32
  }
  func.func @transform_2(%arg0: i32) -> (i32, i32, i32) {
    %c0_i32 = arith.constant 0 : i32
    %c0_i32_0 = arith.constant 0 : i32
    %c0_i32_1 = arith.constant 0 : i32
    return %arg0, %c0_i32, %c0_i32_0 : i32, i32, i32
  }
  func.func @transform_3(%arg0: i32) -> (i32, i32, i32) {
    %c0_i32 = arith.constant 0 : i32
    %c0_i32_0 = arith.constant 0 : i32
    %c0_i32_1 = arith.constant 0 : i32
    return %arg0, %c0_i32, %c0_i32_0 : i32, i32, i32
  }
  func.func @transform_4(%arg0: i32) -> (i32, i32) {
    %c0_i32 = arith.constant 0 : i32
    %c0_i32_0 = arith.constant 0 : i32
    return %arg0, %c0_i32 : i32, i32
  }
  func.func @transform_5(%arg0: i32) -> (i32, i32) {
    %c0_i32 = arith.constant 0 : i32
    %c0_i32_0 = arith.constant 0 : i32
    %c0_i32_1 = arith.constant 0 : i32
    return %c0_i32, %c0_i32_0 : i32, i32
  }
  func.func @transform_6(%arg0: i32) -> (i32, i32) {
    %c0_i32 = arith.constant 0 : i32
    %c0_i32_0 = arith.constant 0 : i32
    %c0_i32_1 = arith.constant 0 : i32
    return %c0_i32, %c0_i32_0 : i32, i32
  }
  func.func @transform_7(%arg0: i32) -> (i32, i32) {
    %c0_i32 = arith.constant 0 : i32
    %c0_i32_0 = arith.constant 0 : i32
    %c0_i32_1 = arith.constant 0 : i32
    return %c0_i32, %c0_i32_0 : i32, i32
  }
  func.func @transform_8(%arg0: i32) -> (i32, i32) {
    %c0_i32 = arith.constant 0 : i32
    %c0_i32_0 = arith.constant 0 : i32
    %c0_i32_1 = arith.constant 0 : i32
    return %c0_i32, %c0_i32_0 : i32, i32
  }
  func.func @transform_9(%arg0: i32) -> (i32, i32) {
    %c0_i32 = arith.constant 0 : i32
    %c0_i32_0 = arith.constant 0 : i32
    return %arg0, %c0_i32 : i32, i32
  }
}

</mosaic_0001>

<llo_original>
// kernel: tpu_custom_call.1
$region0: #{tpu_custom_call.1}
  #allocation0 [shape = 'u32[]', space=smem, size = 0x4, offset = 0x4, fixed_abs, tag = 'smem constant byte address 0x4 - core index']
  #allocation1 [shape = 'u32[144,128]{1,0:T(1,128)}', space=vmem, size = 0x12000, scoped, tag = 'internal scratch']
  %s0 = inlined_call_operand.hbm [shape: f32[3], index: 0, kind: input, shape index: {}]
  %s1 = inlined_call_operand.hbm [shape: bf16[8,32], index: 1, kind: input, shape index: {}]
  %s2 = inlined_call_operand.hbm [shape: bf16[8,8,32], index: 2, kind: input, shape index: {}]
  %s3 = inlined_call_operand.hbm [shape: bf16[8,8,32], index: 3, kind: input, shape index: {}]
  %s4 = inlined_call_operand.hbm [shape: s32[8,8], index: 4, kind: input, shape index: {}]
  %s5 = inlined_call_operand.hbm [shape: bf16[32,32], index: 5, kind: input, shape index: {}]
  %s6 = inlined_call_operand.hbm [shape: bf16[32,32], index: 6, kind: input, shape index: {}]
  %s7 = inlined_call_operand.hbm [shape: f32[1,32], index: 7, kind: input, shape index: {}]
  %s8 = inlined_call_operand.hbm [shape: f32[1,32], index: 8, kind: input, shape index: {}]
  %s9 = inlined_call_operand.hbm [shape: f32[8,32], index: 9, kind: output, shape index: {}]
  %s10 = sld [smem:[#allocation0]]
  $region82: #{tpu_custom_call.1} parent=0
    _
  %s12 = ssub.s32 1, %s10
  %s13 = scalar_select 0, %s12, %s10
  $region1: #{tpu_custom_call.1} parent=0
    #allocation2 [shape = 'u8[512]{0}', space=smem, size = 0x200, scoped, tag = 'input window, operand 0, single buffered']
    #allocation3 [shape = 's32[1]{0}', space=sflag, size = 0x4, scoped, tag = 'scoped memory for tpu_custom_call.1']
    #allocation4 [shape = 's32[1]{0}', space=sflag, size = 0x4, scoped, tag = 'scoped memory for tpu_custom_call.1']
    #allocation5 [shape = 's32[1]{0}', space=sflag, size = 0x4, scoped, tag = 'scoped memory for tpu_custom_call.1']
    #allocation6 [shape = 'u8[2048]{0}', space=vmem, size = 0x800, scoped, tag = 'input window, operand 1, single buffered']
    #allocation7 [shape = 'u8[16384]{0}', space=vmem, size = 0x4000, scoped, tag = 'input window, operand 2, single buffered']
    #allocation8 [shape = 's32[1]{0}', space=sflag, size = 0x4, scoped, tag = 'scoped memory for tpu_custom_call.1']
    #allocation9 [shape = 'u8[16384]{0}', space=vmem, size = 0x4000, scoped, tag = 'input window, operand 3, single buffered']
    #allocation10 [shape = 'u8[4096]{0}', space=vmem, size = 0x1000, scoped, tag = 'input window, operand 4, single buffered']
    #allocation11 [shape = 's32[1]{0}', space=sflag, size = 0x4, scoped, tag = 'scoped memory for tpu_custom_call.1']
    #allocation12 [shape = 'u8[8192]{0}', space=vmem, size = 0x2000, scoped, tag = 'input window, operand 5, single buffered']
    #allocation13 [shape = 'u8[8192]{0}', space=vmem, size = 0x2000, scoped, tag = 'input window, operand 6, single buffered']
    #allocation14 [shape = 's32[1]{0}', space=sflag, size = 0x4, scoped, tag = 'scoped memory for tpu_custom_call.1']
    #allocation15 [shape = 'u8[512]{0}', space=vmem, size = 0x400, scoped, tag = 'input window, operand 7, single buffered']
    #allocation16 [shape = 'u8[512]{0}', space=vmem, size = 0x400, scoped, tag = 'input window, operand 8, single buffered']
    #allocation17 [shape = 's32[1]{0}', space=sflag, size = 0x4, scoped, tag = 'scoped memory for tpu_custom_call.1']
    #allocation18 [shape = 'u8[4096]{0}', space=vmem, size = 0x1000, scoped, tag = 'output window, operand 0, single buffered']
    %14 = vsyncpa [#allocation5], 0
    %15 = vsyncpa [#allocation3], 0
    %16 = vsyncpa [#allocation8], 0
    %17 = vsyncpa [#allocation11], 0
    %18 = vsyncpa [#allocation14], 0
    %19 = vsyncpa [#allocation17], 0
    %20 = vsyncpa [#allocation4], 0
    // Predicated region
    $region2: #{tpu_custom_call.1} parent=1 // pred_check
      _
    $region3: #{tpu_custom_call.1} parent=1 // pred_check_branch
      %22 = sbr.rel (0) target = $region5
    $region4: #{tpu_custom_call.1} parent=1 // pred_region
      %s24 = ssub.s32 16, 16
      %25 = vsyncadd [#allocation5], %s24
      %28 = dma.hbm_to_smem %s0, 16, [#allocation2], [#allocation5]
    $region5: #{tpu_custom_call.1} parent=1 // pred_fallthru
      _
    // Predicated region
    $region6: #{tpu_custom_call.1} parent=1 // pred_check
      _
    $region7: #{tpu_custom_call.1} parent=1 // pred_check_branch
      %30 = sbr.rel (0) target = $region9
    $region8: #{tpu_custom_call.1} parent=1 // pred_region
      %s32 = ssub.s32 64, 64
      %33 = vsyncadd [#allocation3], %s32
      %s35 = sshll.u32 [#allocation6], 4
      %s36 = int_to_ptr.vmem [resolvable:$true] %s35
      %38 = dma.hbm_to_vmem [thread:$0]  %s1, 64, %s36, [#allocation3]
    $region9: #{tpu_custom_call.1} parent=1 // pred_fallthru
      _
    // Predicated region
    $region10: #{tpu_custom_call.1} parent=1 // pred_check
      _
    $region11: #{tpu_custom_call.1} parent=1 // pred_check_branch
      %40 = sbr.rel (0) target = $region13
    $region12: #{tpu_custom_call.1} parent=1 // pred_region
      %s42 = ssub.s32 512, 512
      %43 = vsyncadd [#allocation8], %s42
      %s44 = sshll.u32 [#allocation7], 4
      %s45 = int_to_ptr.vmem [resolvable:$true] %s44
      %50 = dma.hbm_to_vmem [thread:$0]  %s2, 512, %s45, [#allocation8], 64, 64, 4
    $region13: #{tpu_custom_call.1} parent=1 // pred_fallthru
      _
    // Predicated region
    $region14: #{tpu_custom_call.1} parent=1 // pred_check
      _
    $region15: #{tpu_custom_call.1} parent=1 // pred_check_branch
      %52 = sbr.rel (0) target = $region17
    $region16: #{tpu_custom_call.1} parent=1 // pred_region
      %s54 = ssub.s32 512, 512
      %55 = vsyncadd [#allocation8], %s54
      %s56 = sshll.u32 [#allocation9], 4
      %s57 = int_to_ptr.vmem [resolvable:$true] %s56
      %62 = dma.hbm_to_vmem [thread:$0]  %s3, 512, %s57, [#allocation8], 64, 64, 4
    $region17: #{tpu_custom_call.1} parent=1 // pred_fallthru
      _
    // Predicated region
    $region18: #{tpu_custom_call.1} parent=1 // pred_check
      _
    $region19: #{tpu_custom_call.1} parent=1 // pred_check_branch
      %64 = sbr.rel (0) target = $region21
    $region20: #{tpu_custom_call.1} parent=1 // pred_region
      %s66 = ssub.s32 128, 128
      %67 = vsyncadd [#allocation11], %s66
      %s69 = sshll.u32 [#allocation10], 4
      %s70 = int_to_ptr.vmem [resolvable:$true] %s69
      %72 = dma.hbm_to_vmem [thread:$0]  %s4, 128, %s70, [#allocation11]
    $region21: #{tpu_custom_call.1} parent=1 // pred_fallthru
      _
    // Predicated region
    $region22: #{tpu_custom_call.1} parent=1 // pred_check
      _
    $region23: #{tpu_custom_call.1} parent=1 // pred_check_branch
      %74 = sbr.rel (0) target = $region25
    $region24: #{tpu_custom_call.1} parent=1 // pred_region
      %s76 = ssub.s32 256, 256
      %77 = vsyncadd [#allocation11], %s76
      %s78 = sshll.u32 [#allocation12], 4
      %s79 = int_to_ptr.vmem [resolvable:$true] %s78
      %84 = dma.hbm_to_vmem [thread:$0]  %s5, 256, %s79, [#allocation11], 64, 64, 4
    $region25: #{tpu_custom_call.1} parent=1 // pred_fallthru
      _
    // Predicated region
    $region26: #{tpu_custom_call.1} parent=1 // pred_check
      _
    $region27: #{tpu_custom_call.1} parent=1 // pred_check_branch
      %86 = sbr.rel (0) target = $region29
    $region28: #{tpu_custom_call.1} parent=1 // pred_region
      %s88 = ssub.s32 256, 256
      %89 = vsyncadd [#allocation14], %s88
      %s90 = sshll.u32 [#allocation13], 4
      %s91 = int_to_ptr.vmem [resolvable:$true] %s90
      %96 = dma.hbm_to_vmem [thread:$0]  %s6, 256, %s91, [#allocation14], 64, 64, 4
    $region29: #{tpu_custom_call.1} parent=1 // pred_fallthru
      _
    // Predicated region
    $region30: #{tpu_custom_call.1} parent=1 // pred_check
      _
    $region31: #{tpu_custom_call.1} parent=1 // pred_check_branch
      %98 = sbr.rel (0) target = $region33
    $region32: #{tpu_custom_call.1} parent=1 // pred_region
      %s100 = ssub.s32 16, 16
      %101 = vsyncadd [#allocation14], %s100
      %s103 = sshll.u32 [#allocation15], 4
      %s104 = int_to_ptr.vmem [resolvable:$true] %s103
      %106 = dma.hbm_to_vmem [thread:$0]  %s7, 16, %s104, [#allocation14]
    $region33: #{tpu_custom_call.1} parent=1 // pred_fallthru
      _
    // Predicated region
    $region34: #{tpu_custom_call.1} parent=1 // pred_check
      _
    $region35: #{tpu_custom_call.1} parent=1 // pred_check_branch
      %108 = sbr.rel (0) target = $region37
    $region36: #{tpu_custom_call.1} parent=1 // pred_region
      %s110 = ssub.s32 16, 16
      %111 = vsyncadd [#allocation17], %s110
      %s113 = sshll.u32 [#allocation16], 4
      %s114 = int_to_ptr.vmem [resolvable:$true] %s113
      %116 = dma.hbm_to_vmem [thread:$0]  %s8, 16, %s114, [#allocation17]
    $region37: #{tpu_custom_call.1} parent=1 // pred_fallthru
      _
    // Predicated region
    $region38: #{tpu_custom_call.1} parent=1 // pred_check
      _
    $region39: #{tpu_custom_call.1} parent=1 // pred_check_branch
      %118 = sbr.rel (0) target = $region41
    $region40: #{tpu_custom_call.1} parent=1 // pred_region
      %119 = dma.done [#allocation5], 16
    $region41: #{tpu_custom_call.1} parent=1 // pred_fallthru
      _
    // Predicated region
    $region42: #{tpu_custom_call.1} parent=1 // pred_check
      _
    $region43: #{tpu_custom_call.1} parent=1 // pred_check_branch
      %121 = sbr.rel (0) target = $region45
    $region44: #{tpu_custom_call.1} parent=1 // pred_region
      %122 = dma.done [#allocation3], 64
    $region45: #{tpu_custom_call.1} parent=1 // pred_fallthru
      _
    // Predicated region
    $region46: #{tpu_custom_call.1} parent=1 // pred_check
      _
    $region47: #{tpu_custom_call.1} parent=1 // pred_check_branch
      %124 = sbr.rel (0) target = $region49
    $region48: #{tpu_custom_call.1} parent=1 // pred_region
      %125 = dma.done [#allocation8], 512
    $region49: #{tpu_custom_call.1} parent=1 // pred_fallthru
      _
    // Predicated region
    $region50: #{tpu_custom_call.1} parent=1 // pred_check
      _
    $region51: #{tpu_custom_call.1} parent=1 // pred_check_branch
      %127 = sbr.rel (0) target = $region53
    $region52: #{tpu_custom_call.1} parent=1 // pred_region
      %128 = dma.done [#allocation8], 512
    $region53: #{tpu_custom_call.1} parent=1 // pred_fallthru
      _
    // Predicated region
    $region54: #{tpu_custom_call.1} parent=1 // pred_check
      _
    $region55: #{tpu_custom_call.1} parent=1 // pred_check_branch
      %130 = sbr.rel (0) target = $region57
    $region56: #{tpu_custom_call.1} parent=1 // pred_region
      %131 = dma.done [#allocation11], 128
    $region57: #{tpu_custom_call.1} parent=1 // pred_fallthru
      _
    // Predicated region
    $region58: #{tpu_custom_call.1} parent=1 // pred_check
      _
    $region59: #{tpu_custom_call.1} parent=1 // pred_check_branch
      %133 = sbr.rel (0) target = $region61
    $region60: #{tpu_custom_call.1} parent=1 // pred_region
      %134 = dma.done [#allocation11], 256
    $region61: #{tpu_custom_call.1} parent=1 // pred_fallthru
      _
    // Predicated region
    $region62: #{tpu_custom_call.1} parent=1 // pred_check
      _
    $region63: #{tpu_custom_call.1} parent=1 // pred_check_branch
      %136 = sbr.rel (0) target = $region65
    $region64: #{tpu_custom_call.1} parent=1 // pred_region
      %137 = dma.done [#allocation14], 256
    $region65: #{tpu_custom_call.1} parent=1 // pred_fallthru
      _
    // Predicated region
    $region66: #{tpu_custom_call.1} parent=1 // pred_check
      _
    $region67: #{tpu_custom_call.1} parent=1 // pred_check_branch
      %139 = sbr.rel (0) target = $region69
    $region68: #{tpu_custom_call.1} parent=1 // pred_region
      %140 = dma.done [#allocation14], 16
    $region69: #{tpu_custom_call.1} parent=1 // pred_fallthru
      _
    // Predicated region
    $region70: #{tpu_custom_call.1} parent=1 // pred_check
      _
    $region71: #{tpu_custom_call.1} parent=1 // pred_check_branch
      %142 = sbr.rel (0) target = $region73
    $region72: #{tpu_custom_call.1} parent=1 // pred_region
      %143 = dma.done [#allocation17], 16
    $region73: #{tpu_custom_call.1} parent=1 // pred_fallthru
      _
    %144 = sfence
    %s146 = sld [smem:[#allocation2]]
    %s147 = sld [smem:[#allocation2 + $0x2]]
    %v148 = vld [vmem:[#allocation6] sm:$0xf]
    %v149 = vld [vmem:[#allocation13] sm:$0xf]
    %v150 = vld [vmem:[#allocation13 + $0x4] sm:$0xf]
    %v151 = vld [vmem:[#allocation13 + $0x8] sm:$0xf]
    %v152 = vld [vmem:[#allocation13 + $0xc] sm:$0xf]
    %v153 = vld [vmem:[#allocation16] sm:$0x1]
    %v155 = vlaneseq
    %v156 = vshrl.u32 %v155, 7
    %v157 = vsub.s32 0, %v156
    %v158 = vrot.slane %v153, %v157
    %v164 = vunpack.c.l.b16 %v149
    %v165 = vunpack.c.l.b16 %v150
    %v166 = vunpack.c.l.b16 %v151
    %v167 = vunpack.c.l.b16 %v152
    %v168 = vpack.c.b16 %v165, %v164
    %v169 = vpack.c.b16 %v167, %v166
    %vm172 = vcmask 261120
    %v174 = vsel %vm172, %v148, 0
    %176 = vmatprep.subr.bf16.mxu0 0
    %177 = vmatpush1.bf16.msra.mxu0 %v168
    %178 = vmatprep.subr.bf16.mxu0 0
    %179 = vmatpush1.bf16.msra.mxu0 %v169
    %180 = vmatprep.subr.bf16.mxu0 0
    %181 = vmatpush1.bf16.msra.mxu0 0
    %182 = vmatprep.subr.bf16.mxu0 0
    %183 = vmatpush1.bf16.msra.mxu0 0
    %184 = vmatprep.subr.bf16.mxu0 0
    %185 = vmatpush1.bf16.msra.mxu0 0
    %186 = vmatprep.subr.bf16.mxu0 0
    %187 = vmatpush1.bf16.msra.mxu0 0
    %188 = vmatprep.subr.bf16.mxu0 0
    %189 = vmatpush1.bf16.msra.mxu0 0
    %190 = vmatprep.subr.bf16.mxu0 0
    %191 = vmatpush1.bf16.msra.mxu0 0
    %192 = vmatprep.subr.bf16.mxu0 0
    %193 = vmatpush1.bf16.msra.mxu0 0
    %194 = vmatprep.subr.bf16.mxu0 0
    %195 = vmatpush1.bf16.msra.mxu0 0
    %196 = vmatprep.subr.bf16.mxu0 0
    %197 = vmatpush1.bf16.msra.mxu0 0
    %198 = vmatprep.subr.bf16.mxu0 0
    %199 = vmatpush1.bf16.msra.mxu0 0
    %200 = vmatprep.subr.bf16.mxu0 0
    %201 = vmatpush1.bf16.msra.mxu0 0
    %202 = vmatprep.subr.bf16.mxu0 0
    %203 = vmatpush1.bf16.msra.mxu0 0
    %204 = vmatprep.subr.bf16.mxu0 0
    %205 = vmatpush1.bf16.msra.mxu0 0
    %206 = vmatprep.subr.bf16.mxu0 0
    %207 = vmatpush1.bf16.msra.mxu0 0
    %208 = vmatprep.mubr.bf16.mxu0 0
    %209 = vmatmul.mubr.bf16.gmra.mrb[0].mxu0 %v174
    %v210 = vpop.f32.mrb[0].mxu0
    %v211 = vadd.f32 %v158, %v210
    %v212 = vpop.f32.mrb[0].mxu0
    %v213 = vpop.f32.mrb[0].mxu0
    %v214 = vpop.f32.mrb[0].mxu0
    %215 = vdwg.mxu0
    %v216 = vld [vmem:[#allocation7] sm:$0xf]
    %v217 = vld [vmem:[#allocation7 + $0x4] sm:$0xf]
    %v218 = vld [vmem:[#allocation7 + $0x8] sm:$0xf]
    %v219 = vld [vmem:[#allocation7 + $0xc] sm:$0xf]
    %v220 = vld [vmem:[#allocation7 + $0x10] sm:$0xf]
    %v221 = vld [vmem:[#allocation7 + $0x14] sm:$0xf]
    %v222 = vld [vmem:[#allocation7 + $0x18] sm:$0xf]
    %v223 = vld [vmem:[#allocation7 + $0x1c] sm:$0xf]
    %v224 = vld [vmem:[#allocation12] sm:$0xf]
    %v225 = vld [vmem:[#allocation12 + $0x4] sm:$0xf]
    %v226 = vld [vmem:[#allocation12 + $0x8] sm:$0xf]
    %v227 = vld [vmem:[#allocation12 + $0xc] sm:$0xf]
    %v236 = vunpack.c.l.b16 %v216
    %v237 = vunpack.c.l.b16 %v217
    %v238 = vunpack.c.l.b16 %v218
    %v239 = vunpack.c.l.b16 %v219
    %v240 = vunpack.c.l.b16 %v220
    %v241 = vunpack.c.l.b16 %v221
    %v242 = vunpack.c.l.b16 %v222
    %v243 = vunpack.c.l.b16 %v223
    %v244 = vpack.c.b16 %v237, %v236
    %v245 = vpack.c.b16 %v239, %v238
    %v246 = vpack.c.b16 %v241, %v240
    %v247 = vpack.c.b16 %v243, %v242
    %v252 = vunpack.c.l.b16 %v224
    %v253 = vunpack.c.l.b16 %v225
    %v254 = vunpack.c.l.b16 %v226
    %v255 = vunpack.c.l.b16 %v227
    %v256 = vpack.c.b16 %v253, %v252
    %v257 = vpack.c.b16 %v255, %v254
    %v261 = vsel %vm172, %v244, 0
    %v264 = vsel %vm172, %v245, 0
    %v267 = vsel %vm172, %v246, 0
    %v270 = vsel %vm172, %v247, 0
    %272 = vmatprep.subr.bf16.mxu0 0
    %273 = vmatpush1.bf16.msra.mxu0 %v256
    %274 = vmatprep.subr.bf16.mxu0 0
    %275 = vmatpush1.bf16.msra.mxu0 %v257
    %276 = vmatprep.subr.bf16.mxu0 0
    %277 = vmatpush1.bf16.msra.mxu0 0
    %278 = vmatprep.subr.bf16.mxu0 0
    %279 = vmatpush1.bf16.msra.mxu0 0
    %280 = vmatprep.subr.bf16.mxu0 0
    %281 = vmatpush1.bf16.msra.mxu0 0
    %282 = vmatprep.subr.bf16.mxu0 0
    %283 = vmatpush1.bf16.msra.mxu0 0
    %284 = vmatprep.subr.bf16.mxu0 0
    %285 = vmatpush1.bf16.msra.mxu0 0
    %286 = vmatprep.subr.bf16.mxu0 0
    %287 = vmatpush1.bf16.msra.mxu0 0
    %288 = vmatprep.subr.bf16.mxu0 0
    %289 = vmatpush1.bf16.msra.mxu0 0
    %290 = vmatprep.subr.bf16.mxu0 0
    %291 = vmatpush1.bf16.msra.mxu0 0
    %292 = vmatprep.subr.bf16.mxu0 0
    %293 = vmatpush1.bf16.msra.mxu0 0
    %294 = vmatprep.subr.bf16.mxu0 0
    %295 = vmatpush1.bf16.msra.mxu0 0
    %296 = vmatprep.subr.bf16.mxu0 0
    %297 = vmatpush1.bf16.msra.mxu0 0
    %298 = vmatprep.subr.bf16.mxu0 0
    %299 = vmatpush1.bf16.msra.mxu0 0
    %300 = vmatprep.subr.bf16.mxu0 0
    %301 = vmatpush1.bf16.msra.mxu0 0
    %302 = vmatprep.subr.bf16.mxu0 0
    %303 = vmatpush1.bf16.msra.mxu0 0
    %304 = vmatprep.mubr.bf16.mxu0 0
    %305 = vmatmul.mubr.bf16.gmra.mrb[0].mxu0 %v261
    %v306 = vpop.f32.mrb[0].mxu0
    %v307 = vadd.f32 0.0, %v306
    %v308 = vpop.f32.mrb[0].mxu0
    %v309 = vpop.f32.mrb[0].mxu0
    %v310 = vadd.f32 0.0, %v309
    %v311 = vpop.f32.mrb[0].mxu0
    %312 = vmatprep.mubr.bf16.mxu0 0
    %313 = vmatmul.mubr.bf16.gmra.mrb[0].mxu0 %v264
    %v314 = vpop.f32.mrb[0].mxu0
    %v315 = vadd.f32 0.0, %v314
    %v316 = vpop.f32.mrb[0].mxu0
    %v317 = vpop.f32.mrb[0].mxu0
    %v318 = vadd.f32 0.0, %v317
    %v319 = vpop.f32.mrb[0].mxu0
    %320 = vmatprep.mubr.bf16.mxu0 0
    %321 = vmatmul.mubr.bf16.gmra.mrb[0].mxu0 %v267
    %v322 = vpop.f32.mrb[0].mxu0
    %v323 = vadd.f32 0.0, %v322
    %v324 = vpop.f32.mrb[0].mxu0
    %v325 = vpop.f32.mrb[0].mxu0
    %v326 = vadd.f32 0.0, %v325
    %v327 = vpop.f32.mrb[0].mxu0
    %328 = vmatprep.mubr.bf16.mxu0 0
    %329 = vmatmul.mubr.bf16.gmra.mrb[0].mxu0 %v270
    %v330 = vpop.f32.mrb[0].mxu0
    %v331 = vadd.f32 0.0, %v330
    %v332 = vpop.f32.mrb[0].mxu0
    %v333 = vpop.f32.mrb[0].mxu0
    %v334 = vadd.f32 0.0, %v333
    %v335 = vpop.f32.mrb[0].mxu0
    %336 = vdwg.mxu0
    %v338 = vcombine.high %v211, %v211
    %v340 = vunpack.c.l.s4 1966171168
    %v341 = vunpack.c.0.s8 %v340
    %v342 = vlaneseq
    %v343 = vshrl.u32 %v342, 7
    %v344 = vsub.s32 %v341, %v343
    %v345 = vrot.slane %v211, %v344
    %v347 = vunpack.c.l.s4 1966171168
    %v348 = vunpack.c.0.s8 %v347
    %v349 = vlaneseq
    %v350 = vshrl.u32 %v349, 7
    %v351 = vsub.s32 %v348, %v350
    %v352 = vrot.slane %v338, %v351
    %v353 = vcombine.high %v345, %v345
    %v354 = vcombine.high %v352, %v352
    %v356 = vunpack.c.l.s4 1966171168
    %v357 = vunpack.c.0.s8 %v356
    %v358 = vlaneseq
    %v359 = vshrl.u32 %v358, 7
    %v360 = vsub.s32 %v357, %v359
    %v361 = vrot.slane %v345, %v360
    %v363 = vunpack.c.l.s4 1966171168
    %v364 = vunpack.c.0.s8 %v363
    %v365 = vlaneseq
    %v366 = vshrl.u32 %v365, 7
    %v367 = vsub.s32 %v364, %v366
    %v368 = vrot.slane %v352, %v367
    %v370 = vunpack.c.l.s4 1966171168
    %v371 = vunpack.c.0.s8 %v370
    %v372 = vlaneseq
    %v373 = vshrl.u32 %v372, 7
    %v374 = vsub.s32 %v371, %v373
    %v375 = vrot.slane %v353, %v374
    %v377 = vunpack.c.l.s4 1966171168
    %v378 = vunpack.c.0.s8 %v377
    %v379 = vlaneseq
    %v380 = vshrl.u32 %v379, 7
    %v381 = vsub.s32 %v378, %v380
    %v382 = vrot.slane %v354, %v381
    %v383 = vcombine.high %v361, %v361
    %v384 = vcombine.high %v368, %v368
    %v385 = vcombine.high %v375, %v375
    %v386 = vcombine.high %v382, %v382
    %v387 = vlaneseq
    %v388 = vshrl.u32 %v387, 7
    %v389 = vsub.s32 0, %v388
    %v390 = vrot.slane %v361, %v389
    %v391 = vlaneseq
    %v392 = vshrl.u32 %v391, 7
    %v393 = vsub.s32 0, %v392
    %v394 = vrot.slane %v375, %v393
    %v395 = vlaneseq
    %v396 = vshrl.u32 %v395, 7
    %v397 = vsub.s32 0, %v396
    %v398 = vrot.slane %v383, %v397
    %v399 = vlaneseq
    %v400 = vshrl.u32 %v399, 7
    %v401 = vsub.s32 0, %v400
    %v402 = vrot.slane %v385, %v401
    %v403 = vlaneseq
    %v404 = vshrl.u32 %v403, 7
    %v405 = vsub.s32 0, %v404
    %v406 = vrot.slane %v368, %v405
    %v407 = vlaneseq
    %v408 = vshrl.u32 %v407, 7
    %v409 = vsub.s32 0, %v408
    %v410 = vrot.slane %v382, %v409
    %v411 = vlaneseq
    %v412 = vshrl.u32 %v411, 7
    %v413 = vsub.s32 0, %v412
    %v414 = vrot.slane %v384, %v413
    %v415 = vlaneseq
    %v416 = vshrl.u32 %v415, 7
    %v417 = vsub.s32 0, %v416
    %v418 = vrot.slane %v386, %v417
    %v427 = vadd.f32 %v307, %v390
    %v428 = vadd.f32 %v310, %v394
    %v429 = vadd.f32 %v315, %v398
    %v430 = vadd.f32 %v318, %v402
    %v431 = vadd.f32 %v323, %v406
    %v432 = vadd.f32 %v326, %v410
    %v433 = vadd.f32 %v331, %v414
    %v434 = vadd.f32 %v334, %v418
    %v435 = vmax.f32 %v427, 0.0
    %v436 = vmax.f32 %v428, 0.0
    %v437 = vmax.f32 %v429, 0.0
    %v438 = vmax.f32 %v430, 0.0
    %v439 = vmax.f32 %v431, 0.0
    %v440 = vmax.f32 %v432, 0.0
    %v441 = vmax.f32 %v433, 0.0
    %v442 = vmax.f32 %v434, 0.0
    %v443 = vld [vmem:[#allocation15] sm:$0x1]
    %v445 = vlaneseq
    %v446 = vshrl.u32 %v445, 7
    %v447 = vsub.s32 0, %v446
    %v448 = vrot.slane %v443, %v447
    %v450 = vmul.f32 %v435, %v448
    %v451 = vmul.f32 %v436, %v448
    %v452 = vmul.f32 %v437, %v448
    %v453 = vmul.f32 %v438, %v448
    %v454 = vmul.f32 %v439, %v448
    %v455 = vmul.f32 %v440, %v448
    %v456 = vmul.f32 %v441, %v448
    %v457 = vmul.f32 %v442, %v448
    %v458 = vsel %vm172, %v450, 0.0
    %459 = vadd.xlane.f32.xlu0 %v458
    %v460 = vpop.xlane.xlu0 %459
    %v461 = vsel %vm172, %v451, 0.0
    %462 = vadd.xlane.f32.xlu0 %v461
    %v463 = vpop.xlane.xlu0 %462
    %v464 = vsel %vm172, %v452, 0.0
    %465 = vadd.xlane.f32.xlu0 %v464
    %v466 = vpop.xlane.xlu0 %465
    %v467 = vsel %vm172, %v453, 0.0
    %468 = vadd.xlane.f32.xlu0 %v467
    %v469 = vpop.xlane.xlu0 %468
    %v470 = vsel %vm172, %v454, 0.0
    %471 = vadd.xlane.f32.xlu0 %v470
    %v472 = vpop.xlane.xlu0 %471
    %v473 = vsel %vm172, %v455, 0.0
    %474 = vadd.xlane.f32.xlu0 %v473
    %v475 = vpop.xlane.xlu0 %474
    %v476 = vsel %vm172, %v456, 0.0
    %477 = vadd.xlane.f32.xlu0 %v476
    %v478 = vpop.xlane.xlu0 %477
    %v479 = vsel %vm172, %v457, 0.0
    %480 = vadd.xlane.f32.xlu0 %v479
    %v481 = vpop.xlane.xlu0 %480
    %v482 = vld [vmem:[#allocation10] sm:$0xff]
    %vm483 = vcmp.eq.s32.totalorder %v482, 0
    %v492 = vlaneseq
    %v493 = vand.u32 %v492, 127
    %v494 = vlaneseq
    %v495 = vshrl.u32 %v494, 7
    %v496 = vsub.s32 %v493, %v495
    %v497 = vrot.slane %v460, %v496
    %v498 = vlaneseq
    %v499 = vshrl.u32 %v498, 7
    %v500 = vsub.s32 %v493, %v499
    %v501 = vrot.slane %v463, %v500
    %v502 = vlaneseq
    %v503 = vshrl.u32 %v502, 7
    %v504 = vsub.s32 %v493, %v503
    %v505 = vrot.slane %v466, %v504
    %v506 = vlaneseq
    %v507 = vshrl.u32 %v506, 7
    %v508 = vsub.s32 %v493, %v507
    %v509 = vrot.slane %v469, %v508
    %v510 = vlaneseq
    %v511 = vshrl.u32 %v510, 7
    %v512 = vsub.s32 %v493, %v511
    %v513 = vrot.slane %v472, %v512
    %v514 = vlaneseq
    %v515 = vshrl.u32 %v514, 7
    %v516 = vsub.s32 %v493, %v515
    %v517 = vrot.slane %v475, %v516
    %v518 = vlaneseq
    %v519 = vshrl.u32 %v518, 7
    %v520 = vsub.s32 %v493, %v519
    %v521 = vrot.slane %v478, %v520
    %v522 = vlaneseq
    %v523 = vshrl.u32 %v522, 7
    %v524 = vsub.s32 %v493, %v523
    %v525 = vrot.slane %v481, %v524
    %vm526 = vcmask 1041409
    %v527 = vsel %vm526, %v501, %v497
    %vm528 = vcmask 1042434
    %v529 = vsel %vm528, %v505, %v527
    %vm530 = vcmask 1043459
    %v531 = vsel %vm530, %v509, %v529
    %vm532 = vcmask 1044484
    %v533 = vsel %vm532, %v513, %v531
    %vm534 = vcmask 1045509
    %v535 = vsel %vm534, %v517, %v533
    %vm536 = vcmask 1046534
    %v537 = vsel %vm536, %v521, %v535
    %vm538 = vcmask 1047559
    %v539 = vsel %vm538, %v525, %v537
    %v541 = vsel %vm483, -inf, %v539
    %v542 = vstv %s146
    %v543 = vmul.f32 %v541, %v542
    %vm544 = vcmask 64512
    %v545 = vsel %vm544, %v543, -inf
    %546 = vmax.xlane.f32.xlu0 %v545
    %v547 = vpop.xlane.xlu0 %546
    %v548 = vsub.f32 %v547, 1.0
    %v549 = vstv %s147
    %v550 = vsub.f32 %v547, %v549
    %v551 = vsub.f32 %v543, %v548
    %v552 = vmax.f32 %v551, 0.0
    %v553 = vmul.f32 %v552, %v552
    %v554 = vsel %vm544, %v553, 0.0
    %555 = vadd.xlane.f32.xlu0 %v554
    %v556 = vpop.xlane.xlu0 %555
    %v557 = vsub.f32 %v556, 1.0
    %v558 = vsub.f32 %v550, %v548
    %v559 = vmul.f32 %v558, 0.5
    %v560 = vadd.f32 %v548, %v559
    %v561 = vsub.f32 %v543, %v560
    %v562 = vmax.f32 %v561, 0.0
    %v563 = vmul.f32 %v562, %v562
    %v564 = vsel %vm544, %v563, 0.0
    %565 = vadd.xlane.f32.xlu0 %v564
    %v566 = vpop.xlane.xlu0 %565
    %v567 = vsub.f32 %v566, 1.0
    %v568 = vmul.f32 %v567, %v557
    %vm569 = vcmp.ge.f32.partialorder %v568, 0.0
    %v570 = vsel %vm569, %v560, %v548
    %v571 = vmul.f32 %v559, 0.5
    %v572 = vadd.f32 %v570, %v571
    %v573 = vsub.f32 %v543, %v572
    %v574 = vmax.f32 %v573, 0.0
    %v575 = vmul.f32 %v574, %v574
    %v576 = vsel %vm544, %v575, 0.0
    %577 = vadd.xlane.f32.xlu0 %v576
    %v578 = vpop.xlane.xlu0 %577
    %v579 = vsub.f32 %v578, 1.0
    %v580 = vmul.f32 %v579, %v557
    %vm581 = vcmp.ge.f32.partialorder %v580, 0.0
    %v582 = vsel %vm581, %v572, %v570
    %v583 = vmul.f32 %v571, 0.5
    %v584 = vadd.f32 %v582, %v583
    %v585 = vsub.f32 %v543, %v584
    %v586 = vmax.f32 %v585, 0.0
    %v587 = vmul.f32 %v586, %v586
    %v588 = vsel %vm544, %v587, 0.0
    %589 = vadd.xlane.f32.xlu0 %v588
    %v590 = vpop.xlane.xlu0 %589
    %v591 = vsub.f32 %v590, 1.0
    %v592 = vmul.f32 %v591, %v557
    %vm593 = vcmp.ge.f32.partialorder %v592, 0.0
    %v594 = vsel %vm593, %v584, %v582
    %v595 = vmul.f32 %v583, 0.5
    %v596 = vadd.f32 %v594, %v595
    %v597 = vsub.f32 %v543, %v596
    %v598 = vmax.f32 %v597, 0.0
    %v599 = vmul.f32 %v598, %v598
    %v600 = vsel %vm544, %v599, 0.0
    %601 = vadd.xlane.f32.xlu0 %v600
    %v602 = vpop.xlane.xlu0 %601
    %v603 = vsub.f32 %v602, 1.0
    %v604 = vmul.f32 %v603, %v557
    %vm605 = vcmp.ge.f32.partialorder %v604, 0.0
    %v606 = vsel %vm605, %v596, %v594
    %v607 = vmul.f32 %v595, 0.5
    %v608 = vadd.f32 %v606, %v607
    %v609 = vsub.f32 %v543, %v608
    %v610 = vmax.f32 %v609, 0.0
    %v611 = vmul.f32 %v610, %v610
    %v612 = vsel %vm544, %v611, 0.0
    %613 = vadd.xlane.f32.xlu0 %v612
    %v614 = vpop.xlane.xlu0 %613
    %v615 = vsub.f32 %v614, 1.0
    %v616 = vmul.f32 %v615, %v557
    %vm617 = vcmp.ge.f32.partialorder %v616, 0.0
    %v618 = vsel %vm617, %v608, %v606
    %v619 = vmul.f32 %v607, 0.5
    %v620 = vadd.f32 %v618, %v619
    %v621 = vsub.f32 %v543, %v620
    %v622 = vmax.f32 %v621, 0.0
    %v623 = vmul.f32 %v622, %v622
    %v624 = vsel %vm544, %v623, 0.0
    %625 = vadd.xlane.f32.xlu0 %v624
    %v626 = vpop.xlane.xlu0 %625
    %v627 = vsub.f32 %v626, 1.0
    %v628 = vmul.f32 %v627, %v557
    %vm629 = vcmp.ge.f32.partialorder %v628, 0.0
    %v630 = vsel %vm629, %v620, %v618
    %v631 = vmul.f32 %v619, 0.5
    %v632 = vadd.f32 %v630, %v631
    %v633 = vsub.f32 %v543, %v632
    %v634 = vmax.f32 %v633, 0.0
    %v635 = vmul.f32 %v634, %v634
    %v636 = vsel %vm544, %v635, 0.0
    %637 = vadd.xlane.f32.xlu0 %v636
    %v638 = vpop.xlane.xlu0 %637
    %v639 = vsub.f32 %v638, 1.0
    %v640 = vmul.f32 %v639, %v557
    %vm641 = vcmp.ge.f32.partialorder %v640, 0.0
    %v642 = vsel %vm641, %v632, %v630
    %v643 = vmul.f32 %v631, 0.5
    %v644 = vadd.f32 %v642, %v643
    %v645 = vsub.f32 %v543, %v644
    %v646 = vmax.f32 %v645, 0.0
    %v647 = vmul.f32 %v646, %v646
    %v648 = vsel %vm544, %v647, 0.0
    %649 = vadd.xlane.f32.xlu0 %v648
    %v650 = vpop.xlane.xlu0 %649
    %v651 = vsub.f32 %v650, 1.0
    %v652 = vmul.f32 %v651, %v557
    %vm653 = vcmp.ge.f32.partialorder %v652, 0.0
    %v654 = vsel %vm653, %v644, %v642
    %v655 = vmul.f32 %v643, 0.5
    %v656 = vadd.f32 %v654, %v655
    %v657 = vsub.f32 %v543, %v656
    %v658 = vmax.f32 %v657, 0.0
    %v659 = vmul.f32 %v658, %v658
    %v660 = vsel %vm544, %v659, 0.0
    %661 = vadd.xlane.f32.xlu0 %v660
    %v662 = vpop.xlane.xlu0 %661
    %v663 = vsub.f32 %v662, 1.0
    %v664 = vmul.f32 %v663, %v557
    %vm665 = vcmp.ge.f32.partialorder %v664, 0.0
    %v666 = vsel %vm665, %v656, %v654
    %v667 = vmul.f32 %v655, 0.5
    %v668 = vadd.f32 %v666, %v667
    %v669 = vsub.f32 %v543, %v668
    %v670 = vmax.f32 %v669, 0.0
    %v671 = vmul.f32 %v670, %v670
    %v672 = vsel %vm544, %v671, 0.0
    %673 = vadd.xlane.f32.xlu0 %v672
    %v674 = vpop.xlane.xlu0 %673
    %v675 = vsub.f32 %v674, 1.0
    %v676 = vmul.f32 %v675, %v557
    %vm677 = vcmp.ge.f32.partialorder %v676, 0.0
    %v678 = vsel %vm677, %v668, %v666
    %v679 = vmul.f32 %v667, 0.5
    %v680 = vadd.f32 %v678, %v679
    %v681 = vsub.f32 %v543, %v680
    %v682 = vmax.f32 %v681, 0.0
    %v683 = vmul.f32 %v682, %v682
    %v684 = vsel %vm544, %v683, 0.0
    %685 = vadd.xlane.f32.xlu0 %v684
    %v686 = vpop.xlane.xlu0 %685
    %v687 = vsub.f32 %v686, 1.0
    %v688 = vmul.f32 %v687, %v557
    %vm689 = vcmp.ge.f32.partialorder %v688, 0.0
    %v690 = vsel %vm689, %v680, %v678
    %v691 = vmul.f32 %v679, 0.5
    %v692 = vadd.f32 %v690, %v691
    %v693 = vsub.f32 %v543, %v692
    %v694 = vmax.f32 %v693, 0.0
    %v695 = vmul.f32 %v694, %v694
    %v696 = vsel %vm544, %v695, 0.0
    %697 = vadd.xlane.f32.xlu0 %v696
    %v698 = vpop.xlane.xlu0 %697
    %v699 = vsub.f32 %v698, 1.0
    %v700 = vmul.f32 %v699, %v557
    %vm701 = vcmp.ge.f32.partialorder %v700, 0.0
    %v702 = vsel %vm701, %v692, %v690
    %v703 = vmul.f32 %v691, 0.5
    %v704 = vadd.f32 %v702, %v703
    %v705 = vsub.f32 %v543, %v704
    %v706 = vmax.f32 %v705, 0.0
    %v707 = vmul.f32 %v706, %v706
    %v708 = vsel %vm544, %v707, 0.0
    %709 = vadd.xlane.f32.xlu0 %v708
    %v710 = vpop.xlane.xlu0 %709
    %v711 = vsub.f32 %v710, 1.0
    %v712 = vmul.f32 %v711, %v557
    %vm713 = vcmp.ge.f32.partialorder %v712, 0.0
    %v714 = vsel %vm713, %v704, %v702
    %v715 = vmul.f32 %v703, 0.5
    %v716 = vadd.f32 %v714, %v715
    %v717 = vsub.f32 %v543, %v716
    %v718 = vmax.f32 %v717, 0.0
    %v719 = vmul.f32 %v718, %v718
    %v720 = vsel %vm544, %v719, 0.0
    %721 = vadd.xlane.f32.xlu0 %v720
    %v722 = vpop.xlane.xlu0 %721
    %v723 = vsub.f32 %v722, 1.0
    %v724 = vmul.f32 %v723, %v557
    %vm725 = vcmp.ge.f32.partialorder %v724, 0.0
    %v726 = vsel %vm725, %v716, %v714
    %v727 = vmul.f32 %v715, 0.5
    %v728 = vadd.f32 %v726, %v727
    %v729 = vsub.f32 %v543, %v728
    %v730 = vmax.f32 %v729, 0.0
    %v731 = vmul.f32 %v730, %v730
    %v732 = vsel %vm544, %v731, 0.0
    %733 = vadd.xlane.f32.xlu0 %v732
    %v734 = vpop.xlane.xlu0 %733
    %v735 = vsub.f32 %v734, 1.0
    %v736 = vmul.f32 %v735, %v557
    %vm737 = vcmp.ge.f32.partialorder %v736, 0.0
    %v738 = vsel %vm737, %v728, %v726
    %v739 = vmul.f32 %v727, 0.5
    %v740 = vadd.f32 %v738, %v739
    %v741 = vsub.f32 %v543, %v740
    %v742 = vmax.f32 %v741, 0.0
    %v743 = vmul.f32 %v742, %v742
    %v744 = vsel %vm544, %v743, 0.0
    %745 = vadd.xlane.f32.xlu0 %v744
    %v746 = vpop.xlane.xlu0 %745
    %v747 = vsub.f32 %v746, 1.0
    %v748 = vmul.f32 %v747, %v557
    %vm749 = vcmp.ge.f32.partialorder %v748, 0.0
    %v750 = vsel %vm749, %v740, %v738
    %v751 = vmul.f32 %v739, 0.5
    %v752 = vadd.f32 %v750, %v751
    %v753 = vsub.f32 %v543, %v752
    %v754 = vmax.f32 %v753, 0.0
    %v755 = vmul.f32 %v754, %v754
    %v756 = vsel %vm544, %v755, 0.0
    %757 = vadd.xlane.f32.xlu0 %v756
    %v758 = vpop.xlane.xlu0 %757
    %v759 = vsub.f32 %v758, 1.0
    %v760 = vmul.f32 %v759, %v557
    %vm761 = vcmp.ge.f32.partialorder %v760, 0.0
    %v762 = vsel %vm761, %v752, %v750
    %v763 = vmul.f32 %v751, 0.5
    %v764 = vadd.f32 %v762, %v763
    %v765 = vsub.f32 %v543, %v764
    %v766 = vmax.f32 %v765, 0.0
    %v767 = vmul.f32 %v766, %v766
    %v768 = vsel %vm544, %v767, 0.0
    %769 = vadd.xlane.f32.xlu0 %v768
    %v770 = vpop.xlane.xlu0 %769
    %v771 = vsub.f32 %v770, 1.0
    %v772 = vmul.f32 %v771, %v557
    %vm773 = vcmp.ge.f32.partialorder %v772, 0.0
    %v774 = vsel %vm773, %v764, %v762
    %v775 = vmul.f32 %v763, 0.5
    %v776 = vadd.f32 %v774, %v775
    %v777 = vsub.f32 %v543, %v776
    %v778 = vmax.f32 %v777, 0.0
    %v779 = vmul.f32 %v778, %v778
    %v780 = vsel %vm544, %v779, 0.0
    %781 = vadd.xlane.f32.xlu0 %v780
    %v782 = vpop.xlane.xlu0 %781
    %v783 = vsub.f32 %v782, 1.0
    %v784 = vmul.f32 %v783, %v557
    %vm785 = vcmp.ge.f32.partialorder %v784, 0.0
    %v786 = vsel %vm785, %v776, %v774
    %v787 = vmul.f32 %v775, 0.5
    %v788 = vadd.f32 %v786, %v787
    %v789 = vsub.f32 %v543, %v788
    %v790 = vmax.f32 %v789, 0.0
    %v791 = vmul.f32 %v790, %v790
    %v792 = vsel %vm544, %v791, 0.0
    %793 = vadd.xlane.f32.xlu0 %v792
    %v794 = vpop.xlane.xlu0 %793
    %v795 = vsub.f32 %v794, 1.0
    %v796 = vmul.f32 %v795, %v557
    %vm797 = vcmp.ge.f32.partialorder %v796, 0.0
    %v798 = vsel %vm797, %v788, %v786
    %v799 = vmul.f32 %v787, 0.5
    %v800 = vadd.f32 %v798, %v799
    %v801 = vsub.f32 %v543, %v800
    %v802 = vmax.f32 %v801, 0.0
    %v803 = vmul.f32 %v802, %v802
    %v804 = vsel %vm544, %v803, 0.0
    %805 = vadd.xlane.f32.xlu0 %v804
    %v806 = vpop.xlane.xlu0 %805
    %v807 = vsub.f32 %v806, 1.0
    %v808 = vmul.f32 %v807, %v557
    %vm809 = vcmp.ge.f32.partialorder %v808, 0.0
    %v810 = vsel %vm809, %v800, %v798
    %v811 = vmul.f32 %v799, 0.5
    %v812 = vadd.f32 %v810, %v811
    %v813 = vsub.f32 %v543, %v812
    %v814 = vmax.f32 %v813, 0.0
    %v815 = vmul.f32 %v814, %v814
    %v816 = vsel %vm544, %v815, 0.0
    %817 = vadd.xlane.f32.xlu0 %v816
    %v818 = vpop.xlane.xlu0 %817
    %v819 = vsub.f32 %v818, 1.0
    %v820 = vmul.f32 %v819, %v557
    %vm821 = vcmp.ge.f32.partialorder %v820, 0.0
    %v822 = vsel %vm821, %v812, %v810
    %v823 = vmul.f32 %v811, 0.5
    %v824 = vadd.f32 %v822, %v823
    %v825 = vsub.f32 %v543, %v824
    %v826 = vmax.f32 %v825, 0.0
    %v827 = vmul.f32 %v826, %v826
    %v828 = vsel %vm544, %v827, 0.0
    %829 = vadd.xlane.f32.xlu0 %v828
    %v830 = vpop.xlane.xlu0 %829
    %v831 = vsub.f32 %v830, 1.0
    %v832 = vmul.f32 %v831, %v557
    %vm833 = vcmp.ge.f32.partialorder %v832, 0.0
    %v834 = vsel %vm833, %v824, %v822
    %v835 = vmul.f32 %v823, 0.5
    %v836 = vadd.f32 %v834, %v835
    %v837 = vsub.f32 %v543, %v836
    %v838 = vmax.f32 %v837, 0.0
    %v839 = vmul.f32 %v838, %v838
    %v840 = vsel %vm544, %v839, 0.0
    %841 = vadd.xlane.f32.xlu0 %v840
    %v842 = vpop.xlane.xlu0 %841
    %v843 = vrcp.pop %v842
    %v844 = vmul.f32 %v839, %v843
    %v845 = vlaneseq
    %v846 = vshrl.u32 %v845, 7
    %v847 = vmul.u32 %v846, 8
    %849 = vrot.lane.b32.xlu0 %v844, 8
    %v850 = vpop.permute.xlu0 %849
    %852 = vrot.lane.b32.xlu0 %v844, 16
    %v853 = vpop.permute.xlu0 %852
    %855 = vrot.lane.b32.xlu0 %v844, 24
    %v856 = vpop.permute.xlu0 %855
    %858 = vrot.lane.b32.xlu0 %v844, 32
    %v859 = vpop.permute.xlu0 %858
    %861 = vrot.lane.b32.xlu0 %v844, 40
    %v862 = vpop.permute.xlu0 %861
    %864 = vrot.lane.b32.xlu0 %v844, 48
    %v865 = vpop.permute.xlu0 %864
    %867 = vrot.lane.b32.xlu0 %v844, 56
    %v868 = vpop.permute.xlu0 %867
    %v870 = vsel %vm544, %v844, %v850
    %vm871 = vcmask 130048
    %v872 = vsel %vm871, %v870, %v853
    %vm873 = vcmask 195584
    %v874 = vsel %vm873, %v872, %v856
    %v875 = vsel %vm172, %v874, %v859
    %vm876 = vcmask 326656
    %v877 = vsel %vm876, %v875, %v862
    %vm878 = vcmask 392192
    %v879 = vsel %vm878, %v877, %v865
    %vm880 = vcmask 457728
    %v881 = vsel %vm880, %v879, %v868
    %vm882 = vcmp.ge.s32.totalorder %v493, %v847
    %v883 = vadd.s32 %v847, 8
    %vm884 = vcmp.lt.s32.totalorder %v493, %v883
    %vm885 = vmand %vm882, %vm884
    %v886 = vsel %vm885, %v881, 0.0
    %v887 = vld [vmem:[#allocation9] sm:$0xf]
    %v888 = vld [vmem:[#allocation9 + $0x4] sm:$0xf]
    %v889 = vld [vmem:[#allocation9 + $0x8] sm:$0xf]
    %v890 = vld [vmem:[#allocation9 + $0xc] sm:$0xf]
    %v891 = vld [vmem:[#allocation9 + $0x10] sm:$0xf]
    %v892 = vld [vmem:[#allocation9 + $0x14] sm:$0xf]
    %v893 = vld [vmem:[#allocation9 + $0x18] sm:$0xf]
    %v894 = vld [vmem:[#allocation9 + $0x1c] sm:$0xf]
    %v895 = vunpack.c.l.bf16 %v887
    %v896 = vunpack.c.l.bf16 %v888
    %v897 = vunpack.c.l.bf16 %v889
    %v898 = vunpack.c.l.bf16 %v890
    %v899 = vunpack.c.l.bf16 %v891
    %v900 = vunpack.c.l.bf16 %v892
    %v901 = vunpack.c.l.bf16 %v893
    %v902 = vunpack.c.l.bf16 %v894
    %vm903 = vcmask 523264
    %v905 = vsel %vm903, %v886, 0
    %907 = vmatprep.subr.mxu0 0.0
    %908 = vmatpush1.msra.mxu0 %v895
    %909 = vmatprep.subr.mxu0 0.0
    %910 = vmatpush1.msra.mxu0 %v896
    %911 = vmatprep.subr.mxu0 0.0
    %912 = vmatpush1.msra.mxu0 %v897
    %913 = vmatprep.subr.mxu0 0.0
    %914 = vmatpush1.msra.mxu0 %v898
    %915 = vmatprep.subr.mxu0 0.0
    %916 = vmatpush1.msra.mxu0 %v899
    %917 = vmatprep.subr.mxu0 0.0
    %918 = vmatpush1.msra.mxu0 %v900
    %919 = vmatprep.subr.mxu0 0.0
    %920 = vmatpush1.msra.mxu0 %v901
    %921 = vmatprep.subr.mxu0 0.0
    %922 = vmatpush1.msra.mxu0 %v902
    %923 = vmatprep.subr.mxu0 0.0
    %924 = vmatpush1.msra.mxu0 0.0
    %925 = vmatprep.subr.mxu0 0.0
    %926 = vmatpush1.msra.mxu0 0.0
    %927 = vmatprep.subr.mxu0 0.0
    %928 = vmatpush1.msra.mxu0 0.0
    %929 = vmatprep.subr.mxu0 0.0
    %930 = vmatpush1.msra.mxu0 0.0
    %931 = vmatprep.subr.mxu0 0.0
    %932 = vmatpush1.msra.mxu0 0.0
    %933 = vmatprep.subr.mxu0 0.0
    %934 = vmatpush1.msra.mxu0 0.0
    %935 = vmatprep.subr.mxu0 0.0
    %936 = vmatpush1.msra.mxu0 0.0
    %937 = vmatprep.subr.mxu0 0.0
    %938 = vmatpush1.msra.mxu0 0.0
    %939 = vmatprep.subr.mxu0 0.0
    %940 = vmatpush1.msra.mxu0 0.0
    %941 = vmatprep.subr.mxu0 0.0
    %942 = vmatpush1.msra.mxu0 0.0
    %943 = vmatprep.subr.mxu0 0.0
    %944 = vmatpush1.msra.mxu0 0.0
    %945 = vmatprep.subr.mxu0 0.0
    %946 = vmatpush1.msra.mxu0 0.0
    %947 = vmatprep.subr.mxu0 0.0
    %948 = vmatpush1.msra.mxu0 0.0
    %949 = vmatprep.subr.mxu0 0.0
    %950 = vmatpush1.msra.mxu0 0.0
    %951 = vmatprep.subr.mxu0 0.0
    %952 = vmatpush1.msra.mxu0 0.0
    %953 = vmatprep.subr.mxu0 0.0
    %954 = vmatpush1.msra.mxu0 0.0
    %955 = vmatprep.subr.mxu0 0.0
    %956 = vmatpush1.msra.mxu0 0.0
    %957 = vmatprep.subr.mxu0 0.0
    %958 = vmatpush1.msra.mxu0 0.0
    %959 = vmatprep.subr.mxu0 0.0
    %960 = vmatpush1.msra.mxu0 0.0
    %961 = vmatprep.subr.mxu0 0.0
    %962 = vmatpush1.msra.mxu0 0.0
    %963 = vmatprep.subr.mxu0 0.0
    %964 = vmatpush1.msra.mxu0 0.0
    %965 = vmatprep.subr.mxu0 0.0
    %966 = vmatpush1.msra.mxu0 0.0
    %967 = vmatprep.subr.mxu0 0.0
    %968 = vmatpush1.msra.mxu0 0.0
    %969 = vmatprep.subr.mxu0 0.0
    %970 = vmatpush1.msra.mxu0 0.0
    %971 = vmatprep.mubr.f32.mxu0 0.0
    %972 = vmatmul.mubr.f32.gmra.mrb[0].mxu0 %v905
    %v973 = vpop.f32.mrb[0].mxu0
    %v974 = vadd.f32 0.0, %v973
    %v975 = vpop.f32.mrb[0].mxu0
    %976 = vdwg.mxu0
    %977 = vst.msk [vmem:[#allocation18] sm:$0xff] %vm172, %v974
    // Predicated region
    $region74: #{tpu_custom_call.1} parent=1 // pred_check
      _
    $region75: #{tpu_custom_call.1} parent=1 // pred_check_branch
      %979 = sbr.rel (0) target = $region77
    $region76: #{tpu_custom_call.1} parent=1 // pred_region
      %s981 = ssub.s32 128, 128
      %982 = vsyncadd [#allocation4], %s981
      %s984 = sshll.u32 [#allocation18], 4
      %s985 = int_to_ptr.vmem [resolvable:$true] %s984
      %987 = dma.vmem_to_hbm [thread:$0]  %s985, 128, %s9, [#allocation4]
    $region77: #{tpu_custom_call.1} parent=1 // pred_fallthru
      _
    // Predicated region
    $region78: #{tpu_custom_call.1} parent=1 // pred_check
      _
    $region79: #{tpu_custom_call.1} parent=1 // pred_check_branch
      %989 = sbr.rel (0) target = $region81
    $region80: #{tpu_custom_call.1} parent=1 // pred_region
      %990 = dma.done [#allocation4], 128
    $region81: #{tpu_custom_call.1} parent=1 // pred_fallthru
      _
    %991 = vsyncpa [#allocation3], 1
    %992 = vsyncpa [#allocation8], 1
    %993 = vsyncpa [#allocation11], 1
    %994 = vsyncpa [#allocation14], 1
    %995 = vsyncpa [#allocation17], 1
    %996 = vsyncpa [#allocation4], 1
    %997 = vsyncpa [#allocation5], 1

</llo_original>
